<compile_context>
chip_gen: v7x
topology: tpu7x:2x2x1
jax: 0.10.0
libtpu: 0.0.40
codegen_flags: <defaults>
</compile_context>

<pallas_src>
import jax
import jax.numpy as jnp
from jax import lax
from jax.experimental import pallas as pl
from jax.experimental.pallas import tpu as pltpu

# ----------------------------- scaled-down config -----------------------------
B = 2            # number of clips / batch
C = 4            # image channels
IMG = 16         # spatial size
P = 8            # patch size -> NP = (IMG // P) ** 2 vision tokens
S = 8            # text (compress) sequence length
SQ = 8           # question sequence length
D = 32           # hidden size
H = 2            # attention heads
HD = D // H
FF = 4 * D
VOCAB = 64
NUM_LAYERS = 3
SELECT_LAYER = 2         # scaled-down analogue of select_layer = 15 in the real model
NP = (IMG // P) ** 2     # real vision tokens (4)
NP_PAD = 8               # padded to the 8-row sublane tile
T = NP_PAD + S           # 16 tokens total -> every row-slab boundary is aligned
CPP = C * P * P
SCALE = 1.0 / (HD ** 0.5)
NEG_INF = -1e9


# ------------------------------- fused Pallas kernel ---------------------------
def _layernorm(x, g, b):
    mu = jnp.mean(x, axis=-1, keepdims=True)
    var = jnp.mean((x - mu) ** 2, axis=-1, keepdims=True)
    return (x - mu) * lax.rsqrt(var + 1e-5) * g + b


def _fused_fwd_kernel(patches_ref, seq_ref, mask_ref,
                      pw_ref, pb_ref,
                      wqkv_ref, bqkv_ref, wo_ref, bo_ref,
                      w1_ref, b1_ref, w2_ref, b2_ref,
                      ln1g_ref, ln1b_ref, ln2g_ref, ln2b_ref,
                      out_ref, h_scr):
    """grid = (B,).  One grid step = one clip: patch embed + SELECT_LAYER blocks.

    All per-layer weights are resident in VMEM (stacked (L, ...) refs, constant
    index_map) and the layer loop is an unrolled in-kernel fori_loop, so there is
    no per-layer pipeline overhead and no redundant weight DMA.
    """
    # ---- build the multimodal sequence (8-row, sublane-aligned slab writes) ----
    vis = jnp.dot(patches_ref[0], pw_ref[...],
                  preferred_element_type=jnp.float32) + pb_ref[...]     # (NP_PAD, D)
    h_scr[0:NP_PAD, :] = vis                      # vision tokens (pad rows = bias only)
    h_scr[NP_PAD:T, :] = seq_ref[0]               # text tokens
    x0 = h_scr[...]                               # (T, D) f32 residual stream

    # ---- causal + key-padding bias built in-kernel from the (1, T) mask ----
    row = lax.broadcasted_iota(jnp.int32, (T, T), 0)
    col = lax.broadcasted_iota(jnp.int32, (T, T), 1)
    allow = jnp.logical_and(row >= col, mask_ref[0] > 0.5)   # (1,T) key mask broadcasts
    bias = jnp.where(allow, 0.0, NEG_INF).astype(jnp.float32)           # (T, T)

    def layer_body(l, x):
        # ---- self attention (pre-LN, causal + key padding handled by `bias`) ----
        h = _layernorm(x, ln1g_ref[l], ln1b_ref[l])
        qkv = jnp.dot(h.astype(jnp.bfloat16), wqkv_ref[l],
                      preferred_element_type=jnp.float32) + bqkv_ref[l]  # (T, 3D)
        wo = wo_ref[l]                                                   # (D, D) bf16
        attn = jnp.zeros((T, D), jnp.float32)
        # H == 2 static unroll; output projection accumulated per head so no
        # lane-dim concatenate of HD-wide pieces is needed.
        for hh in range(H):
            qh = qkv[:, hh * HD:(hh + 1) * HD].astype(jnp.bfloat16)
            kh = qkv[:, D + hh * HD:D + (hh + 1) * HD].astype(jnp.bfloat16)
            vh = qkv[:, 2 * D + hh * HD:2 * D + (hh + 1) * HD].astype(jnp.bfloat16)
            # contracting-dim dot_general: K "transpose" folded into the MXU feed
            s = lax.dot_general(qh, kh, (((1,), (1,)), ((), ())),
                                preferred_element_type=jnp.float32) * SCALE + bias
            s = s - jnp.max(s, axis=-1, keepdims=True)
            p = jnp.exp(s)
            p = p * pl.reciprocal(jnp.sum(p, axis=-1, keepdims=True), approx=True)
            oh = jnp.dot(p.astype(jnp.bfloat16), vh,
                         preferred_element_type=jnp.float32)             # (T, HD)
            attn = attn + jnp.dot(oh.astype(jnp.bfloat16),
                                  wo[hh * HD:(hh + 1) * HD, :],
                                  preferred_element_type=jnp.float32)
        x = x + attn + bo_ref[l]

        # ---- MLP (pre-LN) ----
        h2 = _layernorm(x, ln2g_ref[l], ln2b_ref[l])
        up = jnp.dot(h2.astype(jnp.bfloat16), w1_ref[l],
                     preferred_element_type=jnp.float32) + b1_ref[l]
        up = jax.nn.gelu(up, approximate=True)     # Phi's NewGELU (tanh) variant
        mlp = jnp.dot(up.astype(jnp.bfloat16), w2_ref[l],
                      preferred_element_type=jnp.float32) + b2_ref[l]
        return x + mlp

    xf = lax.fori_loop(0, SELECT_LAYER, layer_body, x0, unroll=True)

    # Emit the select-layer hidden states for the text tokens (aligned 8-row slab).
    # TODO(synk): at real scale (D >= 128) this store is lane-dense automatically;
    #             for the toy D=32 it is a small masked vst (negligible: 1 KB/step).
    out_ref[0] = xf[NP_PAD:T, :]


def fused_transformer(patches, seq_emb, full_mask, patch_w, patch_b, layers):
    """One pallas_call: patch embed + SELECT_LAYER transformer blocks, grid=(B,)."""
    L = layers["wqkv"].shape[0]
    bmap3 = lambda b: (b, 0, 0)     # per-batch blocks
    cmap3 = lambda b: (0, 0, 0)     # whole stacked weight slabs, constant index
    cmap2 = lambda b: (0, 0)        # shared 2-D weights

    # NOTE(scale-up): at real Phi dimensions the per-layer slabs would not fit VMEM
    # (especially v7x's 64 MiB); the FF / 3D dims would get a tiling grid axis (or
    # pltpu.emit_pipeline), constant-index blocks would use pipeline_mode=
    # pl.Buffered(1), and vmem_limit_bytes would be set explicitly.  At this toy
    # size total weight footprint is ~50 KB, so whole-slab residency is optimal.
    in_specs = [
        pl.BlockSpec((1, NP_PAD, CPP), bmap3),    # patches (bf16, pad rows zeroed)
        pl.BlockSpec((1, S, D), bmap3),           # text embeddings (f32)
        pl.BlockSpec((1, 1, T), bmap3),           # key-padding mask (f32) -> bias in-kernel
        pl.BlockSpec((CPP, D), cmap2),            # patch_w (bf16)
        pl.BlockSpec((1, D), cmap2),              # patch_b (f32)
        pl.BlockSpec((L, D, 3 * D), cmap3),       # wqkv (bf16)
        pl.BlockSpec((L, 1, 3 * D), cmap3),       # bqkv (f32)
        pl.BlockSpec((L, D, D), cmap3),           # wo (bf16)
        pl.BlockSpec((L, 1, D), cmap3),           # bo (f32)
        pl.BlockSpec((L, D, FF), cmap3),          # w1 (bf16)
        pl.BlockSpec((L, 1, FF), cmap3),          # b1 (f32)
        pl.BlockSpec((L, FF, D), cmap3),          # w2 (bf16)
        pl.BlockSpec((L, 1, D), cmap3),           # b2 (f32)
        pl.BlockSpec((L, 1, D), cmap3),           # ln1g
        pl.BlockSpec((L, 1, D), cmap3),           # ln1b
        pl.BlockSpec((L, 1, D), cmap3),           # ln2g
        pl.BlockSpec((L, 1, D), cmap3),           # ln2b
    ]
    return pl.pallas_call(
        _fused_fwd_kernel,
        out_shape=jax.ShapeDtypeStruct((B, S, D), jnp.float32),
        grid=(B,),
        in_specs=in_specs,
        out_specs=pl.BlockSpec((1, S, D), bmap3),
        scratch_shapes=[pltpu.VMEM((T, D), jnp.float32)],
        compiler_params=pltpu.CompilerParams(
            dimension_semantics=("parallel",)),
    )(patches, seq_emb, full_mask, patch_w, patch_b,
      layers["wqkv"], layers["bqkv"], layers["wo"], layers["bo"],
      layers["w1"], layers["b1"], layers["w2"], layers["b2"],
      layers["ln1g"], layers["ln1b"], layers["ln2g"], layers["ln2b"])


# ----------------------------- parameter construction ---------------------------
def init_params(key):
    def nrm(k, shape, scale=0.02, dtype=jnp.float32):
        return (scale * jax.random.normal(k, shape)).astype(dtype)

    keys = jax.random.split(key, 8 + NUM_LAYERS)
    params = {
        "embed": nrm(keys[0], (VOCAB, D)),
        "patch_w": nrm(keys[1], (CPP, D), dtype=jnp.bfloat16),
        "patch_b": jnp.zeros((1, D), jnp.float32),
        "qs_proj": nrm(keys[2], (D, D)),
        "time_head": nrm(keys[3], (D, 1)),
        "layers": [],
    }
    for l in range(NUM_LAYERS):
        lk = jax.random.split(keys[8 + l], 6)
        params["layers"].append({
            "wqkv": nrm(lk[0], (D, 3 * D), dtype=jnp.bfloat16),
            "bqkv": jnp.zeros((1, 3 * D), jnp.float32),
            "wo": nrm(lk[1], (D, D), dtype=jnp.bfloat16),
            "bo": jnp.zeros((1, D), jnp.float32),
            "w1": nrm(lk[2], (D, FF), dtype=jnp.bfloat16),
            "b1": jnp.zeros((1, FF), jnp.float32),
            "w2": nrm(lk[3], (FF, D), dtype=jnp.bfloat16),
            "b2": jnp.zeros((1, D), jnp.float32),
            "ln1g": jnp.ones((1, D), jnp.float32), "ln1b": jnp.zeros((1, D), jnp.float32),
            "ln2g": jnp.ones((1, D), jnp.float32), "ln2b": jnp.zeros((1, D), jnp.float32),
        })
    return params


def _stack_layers(layer_list):
    return {k: jnp.stack([lp[k] for lp in layer_list], axis=0)
            for k in layer_list[0]}


# ----------------------------------- forward ------------------------------------
def phi_compressor_forward(params, clips, seqs, compress_mask, qs, qs_mask, time_labels):
    """PhiCompressor.forward -> forward_compress -> (compress_tokens, loss, similarity)."""
    clips = clips.astype(jnp.float32)
    compress_mask = compress_mask.astype(jnp.float32)
    qs_mask = qs_mask.astype(jnp.float32)

    # --- vision: NCHW -> im2col patches [B, NP, C*P*P], zero-pad to NP_PAD rows ---
    g = IMG // P
    patches = clips.reshape(B, C, g, P, g, P).transpose(0, 2, 4, 1, 3, 5)
    patches = patches.reshape(B, NP, CPP)
    patches = jnp.pad(patches, ((0, 0), (0, NP_PAD - NP), (0, 0))).astype(jnp.bfloat16)

    # --- text / question embeddings (gather = glue, left to XLA) ---
    seq_emb = jnp.take(params["embed"], seqs, axis=0)        # (B, S, D)
    qs_emb = jnp.take(params["embed"], qs, axis=0)           # (B, SQ, D)

    # --- key-padding mask only (B, 1, T); causal+padding bias is built in-kernel ---
    vis_mask = jnp.concatenate(
        [jnp.ones((B, NP), jnp.float32), jnp.zeros((B, NP_PAD - NP), jnp.float32)], axis=1)
    full_mask = jnp.concatenate([vis_mask, compress_mask], axis=1)       # (B, T)
    full_mask = full_mask[:, None, :].astype(jnp.float32)                # (B, 1, T)

    # --- fused kernel: patch embed + layers [0, SELECT_LAYER), selected hidden ---
    stacked = _stack_layers(params["layers"][:SELECT_LAYER])   # layers past select_layer are dead work
    text_hidden = fused_transformer(
        patches, seq_emb, full_mask, params["patch_w"], params["patch_b"], stacked)

    # --- head: compress tokens, similarity vs. question, time loss (tiny; XLA) ---
    ctok = text_hidden * compress_mask[:, :, None]                       # (B, S, D)
    denom_c = jnp.maximum(jnp.sum(compress_mask, axis=-1, keepdims=True), 1.0)
    cpool = jnp.sum(ctok, axis=1) / denom_c                              # (B, D)

    qproj = jax.nn.gelu(
        jnp.einsum("bsd,de->bse", qs_emb, params["qs_proj"]), approximate=True)
    denom_q = jnp.maximum(jnp.sum(qs_mask, axis=-1, keepdims=True), 1.0)
    qpool = jnp.sum(qproj * qs_mask[:, :, None], axis=1) / denom_q       # (B, D)

    num = jnp.sum(cpool * qpool, axis=-1)
    cn = jnp.maximum(jnp.sqrt(jnp.sum(cpool * cpool, axis=-1)), 1e-8)    # torch-style eps clamp
    qn = jnp.maximum(jnp.sqrt(jnp.sum(qpool * qpool, axis=-1)), 1e-8)
    similarity = num / (cn * qn)                                         # (B,)

    tpred = cpool @ params["time_head"]                                  # (B, 1)
    loss = jnp.mean((tpred[:, 0] - time_labels.astype(jnp.float32)) ** 2)
    return ctok, loss, similarity


# ------------------------------------- main --------------------------------------
if __name__ == "__main__":
    root = jax.random.PRNGKey(0)
    k_par, k_clip, k_seq, k_qs, k_tl = jax.random.split(root, 5)

    params = init_params(k_par)

    clips = jax.random.normal(k_clip, (B, C, IMG, IMG), dtype=jnp.float32)
    seqs = jax.random.randint(k_seq, (B, S), 0, VOCAB, dtype=jnp.int32)
    qs = jax.random.randint(k_qs, (B, SQ), 0, VOCAB, dtype=jnp.int32)
    compress_mask = jnp.concatenate(
        [jnp.ones((B, S - 2), jnp.float32), jnp.zeros((B, 2), jnp.float32)], axis=1)
    qs_mask = jnp.concatenate(
        [jnp.ones((B, SQ - 3), jnp.float32), jnp.zeros((B, 3), jnp.float32)], axis=1)
    time_labels = jax.random.uniform(k_tl, (B,), dtype=jnp.float32)

    fwd = jax.jit(phi_compressor_forward)
    compress_tokens, loss, similarity = fwd(
        params, clips, seqs, compress_mask, qs, qs_mask, time_labels)
    jax.block_until_ready((compress_tokens, loss, similarity))

    assert compress_tokens.shape == (B, S, D)
    assert similarity.shape == (B,)
    assert loss.shape == ()
    print("KERNEL_OK")
</pallas_src>

<mosaic_0001>
module attributes {stable_mosaic.version = 11 : i64} {
  func.func @_fused_fwd_kernel(%arg0: i32, %arg1: memref<1x8x256xbf16, #tpu.memory_space<vmem>>, %arg2: memref<1x8x32xf32, #tpu.memory_space<vmem>>, %arg3: memref<1x1x16xf32, #tpu.memory_space<vmem>>, %arg4: memref<256x32xbf16, #tpu.memory_space<vmem>>, %arg5: memref<1x32xf32, #tpu.memory_space<vmem>>, %arg6: memref<2x32x96xbf16, #tpu.memory_space<vmem>>, %arg7: memref<2x1x96xf32, #tpu.memory_space<vmem>>, %arg8: memref<2x32x32xbf16, #tpu.memory_space<vmem>>, %arg9: memref<2x1x32xf32, #tpu.memory_space<vmem>>, %arg10: memref<2x32x128xbf16, #tpu.memory_space<vmem>>, %arg11: memref<2x1x128xf32, #tpu.memory_space<vmem>>, %arg12: memref<2x128x32xbf16, #tpu.memory_space<vmem>>, %arg13: memref<2x1x32xf32, #tpu.memory_space<vmem>>, %arg14: memref<2x1x32xf32, #tpu.memory_space<vmem>>, %arg15: memref<2x1x32xf32, #tpu.memory_space<vmem>>, %arg16: memref<2x1x32xf32, #tpu.memory_space<vmem>>, %arg17: memref<2x1x32xf32, #tpu.memory_space<vmem>>, %arg18: memref<1x8x32xf32, #tpu.memory_space<vmem>>, %arg19: memref<16x32xf32, #tpu.memory_space<vmem>>) attributes {dimension_semantics = [#tpu.dimension_semantics<parallel>], iteration_bounds = array<i64: 2>, scalar_prefetch = 0 : i64, scratch_operands = 1 : i64, tpu.core_type = #tpu.core_type<tc>, window_params = [{transform_indices = @transform_0, window_bounds = array<i64: 1, 8, 256>}, {transform_indices = @transform_1, window_bounds = array<i64: 1, 8, 32>}, {transform_indices = @transform_2, window_bounds = array<i64: 1, 1, 16>}, {pipeline_mode = #tpu.pipeline_mode<synchronous>, transform_indices = @transform_3, window_bounds = array<i64: 256, 32>}, {pipeline_mode = #tpu.pipeline_mode<synchronous>, transform_indices = @transform_4, window_bounds = array<i64: 1, 32>}, {pipeline_mode = #tpu.pipeline_mode<synchronous>, transform_indices = @transform_5, window_bounds = array<i64: 2, 32, 96>}, {pipeline_mode = #tpu.pipeline_mode<synchronous>, transform_indices = @transform_6, window_bounds = array<i64: 2, 1, 96>}, {pipeline_mode = #tpu.pipeline_mode<synchronous>, transform_indices = @transform_7, window_bounds = array<i64: 2, 32, 32>}, {pipeline_mode = #tpu.pipeline_mode<synchronous>, transform_indices = @transform_8, window_bounds = array<i64: 2, 1, 32>}, {pipeline_mode = #tpu.pipeline_mode<synchronous>, transform_indices = @transform_9, window_bounds = array<i64: 2, 32, 128>}, {pipeline_mode = #tpu.pipeline_mode<synchronous>, transform_indices = @transform_10, window_bounds = array<i64: 2, 1, 128>}, {pipeline_mode = #tpu.pipeline_mode<synchronous>, transform_indices = @transform_11, window_bounds = array<i64: 2, 128, 32>}, {pipeline_mode = #tpu.pipeline_mode<synchronous>, transform_indices = @transform_12, window_bounds = array<i64: 2, 1, 32>}, {pipeline_mode = #tpu.pipeline_mode<synchronous>, transform_indices = @transform_13, window_bounds = array<i64: 2, 1, 32>}, {pipeline_mode = #tpu.pipeline_mode<synchronous>, transform_indices = @transform_14, window_bounds = array<i64: 2, 1, 32>}, {pipeline_mode = #tpu.pipeline_mode<synchronous>, transform_indices = @transform_15, window_bounds = array<i64: 2, 1, 32>}, {pipeline_mode = #tpu.pipeline_mode<synchronous>, transform_indices = @transform_16, window_bounds = array<i64: 2, 1, 32>}, {transform_indices = @transform_17, window_bounds = array<i64: 1, 8, 32>}]} {
    %c0 = arith.constant 0 : index
    %c0_0 = arith.constant 0 : index
    %c0_1 = arith.constant 0 : index
    %0 = vector.load %arg1[%c0, %c0_0, %c0_1] : memref<1x8x256xbf16, #tpu.memory_space<vmem>>, vector<1x8x256xbf16>
    %1 = vector.shape_cast %0 : vector<1x8x256xbf16> to vector<8x256xbf16>
    %c0_2 = arith.constant 0 : index
    %c0_3 = arith.constant 0 : index
    %2 = vector.load %arg4[%c0_2, %c0_3] : memref<256x32xbf16, #tpu.memory_space<vmem>>, vector<256x32xbf16>
    %cst = arith.constant dense<0.000000e+00> : vector<8x32xf32>
    %3 = tpu.matmul %1, %2, %cst {dimension_numbers = #tpu.dot_dimension_numbers<[1], [0], [0], [1], [0, 0, 1, 1], [], []>} : vector<8x256xbf16>, vector<256x32xbf16>, vector<8x32xf32> -> vector<8x32xf32>
    %c0_4 = arith.constant 0 : index
    %c0_5 = arith.constant 0 : index
    %4 = vector.load %arg5[%c0_4, %c0_5] : memref<1x32xf32, #tpu.memory_space<vmem>>, vector<1x32xf32>
    %5 = vector.broadcast %4 : vector<1x32xf32> to vector<8x32xf32>
    %6 = arith.addf %3, %5 : vector<8x32xf32>
    %c0_6 = arith.constant 0 : index
    %c0_7 = arith.constant 0 : index
    %7 = vector.load %arg19[%c0_6, %c0_7] : memref<16x32xf32, #tpu.memory_space<vmem>>, vector<8x32xf32>
    tpu.vector_store %arg19[%c0_6, %c0_7], %6 {strides = array<i32>} : memref<16x32xf32, #tpu.memory_space<vmem>>, vector<8x32xf32>,
    %c0_8 = arith.constant 0 : index
    %c0_9 = arith.constant 0 : index
    %c0_10 = arith.constant 0 : index
    %8 = vector.load %arg2[%c0_8, %c0_9, %c0_10] : memref<1x8x32xf32, #tpu.memory_space<vmem>>, vector<1x8x32xf32>
    %9 = vector.shape_cast %8 : vector<1x8x32xf32> to vector<8x32xf32>
    %c8 = arith.constant 8 : index
    %c0_11 = arith.constant 0 : index
    %10 = vector.load %arg19[%c8, %c0_11] : memref<16x32xf32, #tpu.memory_space<vmem>>, vector<8x32xf32>
    tpu.vector_store %arg19[%c8, %c0_11], %9 {strides = array<i32>} : memref<16x32xf32, #tpu.memory_space<vmem>>, vector<8x32xf32>,
    %c0_12 = arith.constant 0 : index
    %c0_13 = arith.constant 0 : index
    %11 = vector.load %arg19[%c0_12, %c0_13] : memref<16x32xf32, #tpu.memory_space<vmem>>, vector<16x32xf32>
    %12 = tpu.iota {dimensions = array<i32: 0>} : vector<16x16xi32>
    %13 = tpu.iota {dimensions = array<i32: 1>} : vector<16x16xi32>
    %14 = arith.cmpi sge, %12, %13 : vector<16x16xi32>
    %c0_14 = arith.constant 0 : index
    %c0_15 = arith.constant 0 : index
    %c0_16 = arith.constant 0 : index
    %15 = vector.load %arg3[%c0_14, %c0_15, %c0_16] : memref<1x1x16xf32, #tpu.memory_space<vmem>>, vector<1x1x16xf32>
    %16 = vector.shape_cast %15 : vector<1x1x16xf32> to vector<1x16xf32>
    %cst_17 = arith.constant 5.000000e-01 : f32
    %17 = vector.broadcast %cst_17 : f32 to vector<1x16xf32>
    %18 = arith.cmpf ogt, %16, %17 : vector<1x16xf32>
    %19 = vector.broadcast %18 : vector<1x16xi1> to vector<16x16xi1>
    %20 = arith.andi %14, %19 : vector<16x16xi1>
    %cst_18 = arith.constant 0.000000e+00 : f32
    %cst_19 = arith.constant -1.000000e+09 : f32
    %21 = vector.broadcast %cst_18 : f32 to vector<16x16xf32>
    %22 = vector.broadcast %cst_19 : f32 to vector<16x16xf32>
    %23 = arith.select %20, %21, %22 : vector<16x16xi1>, vector<16x16xf32>
    %c0_i32 = arith.constant 0 : i32
    %24 = arith.index_cast %c0_i32 : i32 to index
    %c0_20 = arith.constant 0 : index
    %c0_21 = arith.constant 0 : index
    %25 = vector.load %arg14[%24, %c0_20, %c0_21] : memref<2x1x32xf32, #tpu.memory_space<vmem>>, vector<1x1x32xf32>
    %26 = vector.shape_cast %25 : vector<1x1x32xf32> to vector<1x32xf32>
    %27 = arith.index_cast %c0_i32 : i32 to index
    %c0_22 = arith.constant 0 : index
    %c0_23 = arith.constant 0 : index
    %28 = vector.load %arg15[%27, %c0_22, %c0_23] : memref<2x1x32xf32, #tpu.memory_space<vmem>>, vector<1x1x32xf32>
    %29 = vector.shape_cast %28 : vector<1x1x32xf32> to vector<1x32xf32>
    %cst_24 = arith.constant dense<0.000000e+00> : vector<16xf32>
    %30 = vector.multi_reduction <add>, %11, %cst_24 [1] : vector<16x32xf32> to vector<16xf32>
    %31 = vector.shape_cast %30 : vector<16xf32> to vector<16x1xf32>
    %cst_25 = arith.constant 3.200000e+01 : f32
    %32 = vector.broadcast %cst_25 : f32 to vector<16x1xf32>
    %33 = arith.divf %31, %32 : vector<16x1xf32>
    %34 = vector.broadcast %33 : vector<16x1xf32> to vector<16x32xf32>
    %35 = arith.subf %11, %34 : vector<16x32xf32>
    %36 = arith.mulf %35, %35 : vector<16x32xf32>
    %cst_26 = arith.constant dense<0.000000e+00> : vector<16xf32>
    %37 = vector.multi_reduction <add>, %36, %cst_26 [1] : vector<16x32xf32> to vector<16xf32>
    %38 = vector.shape_cast %37 : vector<16xf32> to vector<16x1xf32>
    %cst_27 = arith.constant 3.200000e+01 : f32
    %39 = vector.broadcast %cst_27 : f32 to vector<16x1xf32>
    %40 = arith.divf %38, %39 : vector<16x1xf32>
    %41 = vector.broadcast %33 : vector<16x1xf32> to vector<16x32xf32>
    %42 = arith.subf %11, %41 : vector<16x32xf32>
    %cst_28 = arith.constant 9.99999974E-6 : f32
    %43 = vector.broadcast %cst_28 : f32 to vector<16x1xf32>
    %44 = arith.addf %40, %43 : vector<16x1xf32>
    %45 = math.rsqrt %44 : vector<16x1xf32>
    %46 = vector.broadcast %45 : vector<16x1xf32> to vector<16x32xf32>
    %47 = arith.mulf %42, %46 : vector<16x32xf32>
    %48 = vector.broadcast %26 : vector<1x32xf32> to vector<16x32xf32>
    %49 = arith.mulf %47, %48 : vector<16x32xf32>
    %50 = vector.broadcast %29 : vector<1x32xf32> to vector<16x32xf32>
    %51 = arith.addf %49, %50 : vector<16x32xf32>
    %52 = arith.truncf %51 : vector<16x32xf32> to vector<16x32xbf16>
    %53 = arith.index_cast %c0_i32 : i32 to index
    %c0_29 = arith.constant 0 : index
    %c0_30 = arith.constant 0 : index
    %54 = vector.load %arg6[%53, %c0_29, %c0_30] : memref<2x32x96xbf16, #tpu.memory_space<vmem>>, vector<1x32x96xbf16>
    %55 = vector.shape_cast %54 : vector<1x32x96xbf16> to vector<32x96xbf16>
    %cst_31 = arith.constant dense<0.000000e+00> : vector<16x96xf32>
    %56 = tpu.matmul %52, %55, %cst_31 {dimension_numbers = #tpu.dot_dimension_numbers<[1], [0], [0], [1], [0, 0, 1, 1], [], []>} : vector<16x32xbf16>, vector<32x96xbf16>, vector<16x96xf32> -> vector<16x96xf32>
    %57 = arith.index_cast %c0_i32 : i32 to index
    %c0_32 = arith.constant 0 : index
    %c0_33 = arith.constant 0 : index
    %58 = vector.load %arg7[%57, %c0_32, %c0_33] : memref<2x1x96xf32, #tpu.memory_space<vmem>>, vector<1x1x96xf32>
    %59 = vector.shape_cast %58 : vector<1x1x96xf32> to vector<1x96xf32>
    %60 = vector.broadcast %59 : vector<1x96xf32> to vector<16x96xf32>
    %61 = arith.addf %56, %60 : vector<16x96xf32>
    %62 = arith.index_cast %c0_i32 : i32 to index
    %c0_34 = arith.constant 0 : index
    %c0_35 = arith.constant 0 : index
    %63 = vector.load %arg8[%62, %c0_34, %c0_35] : memref<2x32x32xbf16, #tpu.memory_space<vmem>>, vector<1x32x32xbf16>
    %64 = vector.shape_cast %63 : vector<1x32x32xbf16> to vector<32x32xbf16>
    %cst_36 = arith.constant 0.000000e+00 : f32
    %65 = vector.broadcast %cst_36 : f32 to vector<16x32xf32>
    %66 = vector.extract_strided_slice %61 {offsets = [0, 0], sizes = [16, 16], strides = [1, 1]} : vector<16x96xf32> to vector<16x16xf32>
    %67 = arith.truncf %66 : vector<16x16xf32> to vector<16x16xbf16>
    %68 = vector.extract_strided_slice %61 {offsets = [0, 32], sizes = [16, 16], strides = [1, 1]} : vector<16x96xf32> to vector<16x16xf32>
    %69 = arith.truncf %68 : vector<16x16xf32> to vector<16x16xbf16>
    %70 = vector.extract_strided_slice %61 {offsets = [0, 64], sizes = [16, 16], strides = [1, 1]} : vector<16x96xf32> to vector<16x16xf32>
    %71 = arith.truncf %70 : vector<16x16xf32> to vector<16x16xbf16>
    %cst_37 = arith.constant dense<0.000000e+00> : vector<16x16xf32>
    %72 = tpu.matmul %67, %69, %cst_37 {dimension_numbers = #tpu.dot_dimension_numbers<[1], [1], [0], [0], [0, 0, 1, 0], [], []>} : vector<16x16xbf16>, vector<16x16xbf16>, vector<16x16xf32> -> vector<16x16xf32>
    %cst_38 = arith.constant 2.500000e-01 : f32
    %73 = vector.broadcast %cst_38 : f32 to vector<16x16xf32>
    %74 = arith.mulf %72, %73 : vector<16x16xf32>
    %75 = arith.addf %74, %23 : vector<16x16xf32>
    %cst_39 = arith.constant dense<0xFF800000> : vector<16xf32>
    %76 = vector.multi_reduction <maximumf>, %75, %cst_39 [1] : vector<16x16xf32> to vector<16xf32>
    %77 = vector.shape_cast %76 : vector<16xf32> to vector<16x1xf32>
    %78 = vector.broadcast %77 : vector<16x1xf32> to vector<16x16xf32>
    %79 = arith.subf %75, %78 : vector<16x16xf32>
    %80 = math.exp %79 : vector<16x16xf32>
    %cst_40 = arith.constant dense<0.000000e+00> : vector<16xf32>
    %81 = vector.multi_reduction <add>, %80, %cst_40 [1] : vector<16x16xf32> to vector<16xf32>
    %82 = vector.shape_cast %81 : vector<16xf32> to vector<16x1xf32>
    %83 = tpu.reciprocal %82 {approx = true} : vector<16x1xf32> -> vector<16x1xf32>
    %84 = vector.broadcast %83 : vector<16x1xf32> to vector<16x16xf32>
    %85 = arith.mulf %80, %84 : vector<16x16xf32>
    %86 = arith.truncf %85 : vector<16x16xf32> to vector<16x16xbf16>
    %cst_41 = arith.constant dense<0.000000e+00> : vector<16x16xf32>
    %87 = tpu.matmul %86, %71, %cst_41 {dimension_numbers = #tpu.dot_dimension_numbers<[1], [0], [0], [1], [0, 0, 1, 1], [], []>} : vector<16x16xbf16>, vector<16x16xbf16>, vector<16x16xf32> -> vector<16x16xf32>
    %88 = arith.truncf %87 : vector<16x16xf32> to vector<16x16xbf16>
    %89 = vector.extract_strided_slice %64 {offsets = [0, 0], sizes = [16, 32], strides = [1, 1]} : vector<32x32xbf16> to vector<16x32xbf16>
    %cst_42 = arith.constant dense<0.000000e+00> : vector<16x32xf32>
    %90 = tpu.matmul %88, %89, %cst_42 {dimension_numbers = #tpu.dot_dimension_numbers<[1], [0], [0], [1], [0, 0, 1, 1], [], []>} : vector<16x16xbf16>, vector<16x32xbf16>, vector<16x32xf32> -> vector<16x32xf32>
    %91 = arith.addf %65, %90 : vector<16x32xf32>
    %92 = vector.extract_strided_slice %61 {offsets = [0, 16], sizes = [16, 16], strides = [1, 1]} : vector<16x96xf32> to vector<16x16xf32>
    %93 = arith.truncf %92 : vector<16x16xf32> to vector<16x16xbf16>
    %94 = vector.extract_strided_slice %61 {offsets = [0, 48], sizes = [16, 16], strides = [1, 1]} : vector<16x96xf32> to vector<16x16xf32>
    %95 = arith.truncf %94 : vector<16x16xf32> to vector<16x16xbf16>
    %96 = vector.extract_strided_slice %61 {offsets = [0, 80], sizes = [16, 16], strides = [1, 1]} : vector<16x96xf32> to vector<16x16xf32>
    %97 = arith.truncf %96 : vector<16x16xf32> to vector<16x16xbf16>
    %cst_43 = arith.constant dense<0.000000e+00> : vector<16x16xf32>
    %98 = tpu.matmul %93, %95, %cst_43 {dimension_numbers = #tpu.dot_dimension_numbers<[1], [1], [0], [0], [0, 0, 1, 0], [], []>} : vector<16x16xbf16>, vector<16x16xbf16>, vector<16x16xf32> -> vector<16x16xf32>
    %cst_44 = arith.constant 2.500000e-01 : f32
    %99 = vector.broadcast %cst_44 : f32 to vector<16x16xf32>
    %100 = arith.mulf %98, %99 : vector<16x16xf32>
    %101 = arith.addf %100, %23 : vector<16x16xf32>
    %cst_45 = arith.constant dense<0xFF800000> : vector<16xf32>
    %102 = vector.multi_reduction <maximumf>, %101, %cst_45 [1] : vector<16x16xf32> to vector<16xf32>
    %103 = vector.shape_cast %102 : vector<16xf32> to vector<16x1xf32>
    %104 = vector.broadcast %103 : vector<16x1xf32> to vector<16x16xf32>
    %105 = arith.subf %101, %104 : vector<16x16xf32>
    %106 = math.exp %105 : vector<16x16xf32>
    %cst_46 = arith.constant dense<0.000000e+00> : vector<16xf32>
    %107 = vector.multi_reduction <add>, %106, %cst_46 [1] : vector<16x16xf32> to vector<16xf32>
    %108 = vector.shape_cast %107 : vector<16xf32> to vector<16x1xf32>
    %109 = tpu.reciprocal %108 {approx = true} : vector<16x1xf32> -> vector<16x1xf32>
    %110 = vector.broadcast %109 : vector<16x1xf32> to vector<16x16xf32>
    %111 = arith.mulf %106, %110 : vector<16x16xf32>
    %112 = arith.truncf %111 : vector<16x16xf32> to vector<16x16xbf16>
    %cst_47 = arith.constant dense<0.000000e+00> : vector<16x16xf32>
    %113 = tpu.matmul %112, %97, %cst_47 {dimension_numbers = #tpu.dot_dimension_numbers<[1], [0], [0], [1], [0, 0, 1, 1], [], []>} : vector<16x16xbf16>, vector<16x16xbf16>, vector<16x16xf32> -> vector<16x16xf32>
    %114 = arith.truncf %113 : vector<16x16xf32> to vector<16x16xbf16>
    %115 = vector.extract_strided_slice %64 {offsets = [16, 0], sizes = [16, 32], strides = [1, 1]} : vector<32x32xbf16> to vector<16x32xbf16>
    %cst_48 = arith.constant dense<0.000000e+00> : vector<16x32xf32>
    %116 = tpu.matmul %114, %115, %cst_48 {dimension_numbers = #tpu.dot_dimension_numbers<[1], [0], [0], [1], [0, 0, 1, 1], [], []>} : vector<16x16xbf16>, vector<16x32xbf16>, vector<16x32xf32> -> vector<16x32xf32>
    %117 = arith.addf %91, %116 : vector<16x32xf32>
    %118 = arith.addf %11, %117 : vector<16x32xf32>
    %119 = arith.index_cast %c0_i32 : i32 to index
    %c0_49 = arith.constant 0 : index
    %c0_50 = arith.constant 0 : index
    %120 = vector.load %arg9[%119, %c0_49, %c0_50] : memref<2x1x32xf32, #tpu.memory_space<vmem>>, vector<1x1x32xf32>
    %121 = vector.shape_cast %120 : vector<1x1x32xf32> to vector<1x32xf32>
    %122 = vector.broadcast %121 : vector<1x32xf32> to vector<16x32xf32>
    %123 = arith.addf %118, %122 : vector<16x32xf32>
    %124 = arith.index_cast %c0_i32 : i32 to index
    %c0_51 = arith.constant 0 : index
    %c0_52 = arith.constant 0 : index
    %125 = vector.load %arg16[%124, %c0_51, %c0_52] : memref<2x1x32xf32, #tpu.memory_space<vmem>>, vector<1x1x32xf32>
    %126 = vector.shape_cast %125 : vector<1x1x32xf32> to vector<1x32xf32>
    %127 = arith.index_cast %c0_i32 : i32 to index
    %c0_53 = arith.constant 0 : index
    %c0_54 = arith.constant 0 : index
    %128 = vector.load %arg17[%127, %c0_53, %c0_54] : memref<2x1x32xf32, #tpu.memory_space<vmem>>, vector<1x1x32xf32>
    %129 = vector.shape_cast %128 : vector<1x1x32xf32> to vector<1x32xf32>
    %cst_55 = arith.constant dense<0.000000e+00> : vector<16xf32>
    %130 = vector.multi_reduction <add>, %123, %cst_55 [1] : vector<16x32xf32> to vector<16xf32>
    %131 = vector.shape_cast %130 : vector<16xf32> to vector<16x1xf32>
    %cst_56 = arith.constant 3.200000e+01 : f32
    %132 = vector.broadcast %cst_56 : f32 to vector<16x1xf32>
    %133 = arith.divf %131, %132 : vector<16x1xf32>
    %134 = vector.broadcast %133 : vector<16x1xf32> to vector<16x32xf32>
    %135 = arith.subf %123, %134 : vector<16x32xf32>
    %136 = arith.mulf %135, %135 : vector<16x32xf32>
    %cst_57 = arith.constant dense<0.000000e+00> : vector<16xf32>
    %137 = vector.multi_reduction <add>, %136, %cst_57 [1] : vector<16x32xf32> to vector<16xf32>
    %138 = vector.shape_cast %137 : vector<16xf32> to vector<16x1xf32>
    %cst_58 = arith.constant 3.200000e+01 : f32
    %139 = vector.broadcast %cst_58 : f32 to vector<16x1xf32>
    %140 = arith.divf %138, %139 : vector<16x1xf32>
    %141 = vector.broadcast %133 : vector<16x1xf32> to vector<16x32xf32>
    %142 = arith.subf %123, %141 : vector<16x32xf32>
    %cst_59 = arith.constant 9.99999974E-6 : f32
    %143 = vector.broadcast %cst_59 : f32 to vector<16x1xf32>
    %144 = arith.addf %140, %143 : vector<16x1xf32>
    %145 = math.rsqrt %144 : vector<16x1xf32>
    %146 = vector.broadcast %145 : vector<16x1xf32> to vector<16x32xf32>
    %147 = arith.mulf %142, %146 : vector<16x32xf32>
    %148 = vector.broadcast %126 : vector<1x32xf32> to vector<16x32xf32>
    %149 = arith.mulf %147, %148 : vector<16x32xf32>
    %150 = vector.broadcast %129 : vector<1x32xf32> to vector<16x32xf32>
    %151 = arith.addf %149, %150 : vector<16x32xf32>
    %152 = arith.truncf %151 : vector<16x32xf32> to vector<16x32xbf16>
    %153 = arith.index_cast %c0_i32 : i32 to index
    %c0_60 = arith.constant 0 : index
    %c0_61 = arith.constant 0 : index
    %154 = vector.load %arg10[%153, %c0_60, %c0_61] : memref<2x32x128xbf16, #tpu.memory_space<vmem>>, vector<1x32x128xbf16>
    %155 = vector.shape_cast %154 : vector<1x32x128xbf16> to vector<32x128xbf16>
    %cst_62 = arith.constant dense<0.000000e+00> : vector<16x128xf32>
    %156 = tpu.matmul %152, %155, %cst_62 {dimension_numbers = #tpu.dot_dimension_numbers<[1], [0], [0], [1], [0, 0, 1, 1], [], []>} : vector<16x32xbf16>, vector<32x128xbf16>, vector<16x128xf32> -> vector<16x128xf32>
    %157 = arith.index_cast %c0_i32 : i32 to index
    %c0_63 = arith.constant 0 : index
    %c0_64 = arith.constant 0 : index
    %158 = vector.load %arg11[%157, %c0_63, %c0_64] : memref<2x1x128xf32, #tpu.memory_space<vmem>>, vector<1x1x128xf32>
    %159 = vector.shape_cast %158 : vector<1x1x128xf32> to vector<1x128xf32>
    %160 = vector.broadcast %159 : vector<1x128xf32> to vector<16x128xf32>
    %161 = arith.addf %156, %160 : vector<16x128xf32>
    %162 = arith.mulf %161, %161 : vector<16x128xf32>
    %163 = arith.mulf %161, %162 : vector<16x128xf32>
    %cst_65 = arith.constant 4.471500e-02 : f32
    %164 = vector.broadcast %cst_65 : f32 to vector<16x128xf32>
    %165 = arith.mulf %164, %163 : vector<16x128xf32>
    %166 = arith.addf %161, %165 : vector<16x128xf32>
    %cst_66 = arith.constant 0.797884583 : f32
    %167 = vector.broadcast %cst_66 : f32 to vector<16x128xf32>
    %168 = arith.mulf %167, %166 : vector<16x128xf32>
    %169 = math.tanh %168 : vector<16x128xf32>
    %cst_67 = arith.constant 1.000000e+00 : f32
    %170 = vector.broadcast %cst_67 : f32 to vector<16x128xf32>
    %171 = arith.addf %170, %169 : vector<16x128xf32>
    %cst_68 = arith.constant 5.000000e-01 : f32
    %172 = vector.broadcast %cst_68 : f32 to vector<16x128xf32>
    %173 = arith.mulf %172, %171 : vector<16x128xf32>
    %174 = arith.mulf %161, %173 : vector<16x128xf32>
    %175 = arith.truncf %174 : vector<16x128xf32> to vector<16x128xbf16>
    %176 = arith.index_cast %c0_i32 : i32 to index
    %c0_69 = arith.constant 0 : index
    %c0_70 = arith.constant 0 : index
    %177 = vector.load %arg12[%176, %c0_69, %c0_70] : memref<2x128x32xbf16, #tpu.memory_space<vmem>>, vector<1x128x32xbf16>
    %178 = vector.shape_cast %177 : vector<1x128x32xbf16> to vector<128x32xbf16>
    %cst_71 = arith.constant dense<0.000000e+00> : vector<16x32xf32>
    %179 = tpu.matmul %175, %178, %cst_71 {dimension_numbers = #tpu.dot_dimension_numbers<[1], [0], [0], [1], [0, 0, 1, 1], [], []>} : vector<16x128xbf16>, vector<128x32xbf16>, vector<16x32xf32> -> vector<16x32xf32>
    %180 = arith.index_cast %c0_i32 : i32 to index
    %c0_72 = arith.constant 0 : index
    %c0_73 = arith.constant 0 : index
    %181 = vector.load %arg13[%180, %c0_72, %c0_73] : memref<2x1x32xf32, #tpu.memory_space<vmem>>, vector<1x1x32xf32>
    %182 = vector.shape_cast %181 : vector<1x1x32xf32> to vector<1x32xf32>
    %183 = vector.broadcast %182 : vector<1x32xf32> to vector<16x32xf32>
    %184 = arith.addf %179, %183 : vector<16x32xf32>
    %185 = arith.addf %123, %184 : vector<16x32xf32>
    %c1_i32 = arith.constant 1 : i32
    %186 = arith.index_cast %c1_i32 : i32 to index
    %c0_74 = arith.constant 0 : index
    %c0_75 = arith.constant 0 : index
    %187 = vector.load %arg14[%186, %c0_74, %c0_75] : memref<2x1x32xf32, #tpu.memory_space<vmem>>, vector<1x1x32xf32>
    %188 = vector.shape_cast %187 : vector<1x1x32xf32> to vector<1x32xf32>
    %189 = arith.index_cast %c1_i32 : i32 to index
    %c0_76 = arith.constant 0 : index
    %c0_77 = arith.constant 0 : index
    %190 = vector.load %arg15[%189, %c0_76, %c0_77] : memref<2x1x32xf32, #tpu.memory_space<vmem>>, vector<1x1x32xf32>
    %191 = vector.shape_cast %190 : vector<1x1x32xf32> to vector<1x32xf32>
    %cst_78 = arith.constant dense<0.000000e+00> : vector<16xf32>
    %192 = vector.multi_reduction <add>, %185, %cst_78 [1] : vector<16x32xf32> to vector<16xf32>
    %193 = vector.shape_cast %192 : vector<16xf32> to vector<16x1xf32>
    %cst_79 = arith.constant 3.200000e+01 : f32
    %194 = vector.broadcast %cst_79 : f32 to vector<16x1xf32>
    %195 = arith.divf %193, %194 : vector<16x1xf32>
    %196 = vector.broadcast %195 : vector<16x1xf32> to vector<16x32xf32>
    %197 = arith.subf %185, %196 : vector<16x32xf32>
    %198 = arith.mulf %197, %197 : vector<16x32xf32>
    %cst_80 = arith.constant dense<0.000000e+00> : vector<16xf32>
    %199 = vector.multi_reduction <add>, %198, %cst_80 [1] : vector<16x32xf32> to vector<16xf32>
    %200 = vector.shape_cast %199 : vector<16xf32> to vector<16x1xf32>
    %cst_81 = arith.constant 3.200000e+01 : f32
    %201 = vector.broadcast %cst_81 : f32 to vector<16x1xf32>
    %202 = arith.divf %200, %201 : vector<16x1xf32>
    %203 = vector.broadcast %195 : vector<16x1xf32> to vector<16x32xf32>
    %204 = arith.subf %185, %203 : vector<16x32xf32>
    %cst_82 = arith.constant 9.99999974E-6 : f32
    %205 = vector.broadcast %cst_82 : f32 to vector<16x1xf32>
    %206 = arith.addf %202, %205 : vector<16x1xf32>
    %207 = math.rsqrt %206 : vector<16x1xf32>
    %208 = vector.broadcast %207 : vector<16x1xf32> to vector<16x32xf32>
    %209 = arith.mulf %204, %208 : vector<16x32xf32>
    %210 = vector.broadcast %188 : vector<1x32xf32> to vector<16x32xf32>
    %211 = arith.mulf %209, %210 : vector<16x32xf32>
    %212 = vector.broadcast %191 : vector<1x32xf32> to vector<16x32xf32>
    %213 = arith.addf %211, %212 : vector<16x32xf32>
    %214 = arith.truncf %213 : vector<16x32xf32> to vector<16x32xbf16>
    %215 = arith.index_cast %c1_i32 : i32 to index
    %c0_83 = arith.constant 0 : index
    %c0_84 = arith.constant 0 : index
    %216 = vector.load %arg6[%215, %c0_83, %c0_84] : memref<2x32x96xbf16, #tpu.memory_space<vmem>>, vector<1x32x96xbf16>
    %217 = vector.shape_cast %216 : vector<1x32x96xbf16> to vector<32x96xbf16>
    %cst_85 = arith.constant dense<0.000000e+00> : vector<16x96xf32>
    %218 = tpu.matmul %214, %217, %cst_85 {dimension_numbers = #tpu.dot_dimension_numbers<[1], [0], [0], [1], [0, 0, 1, 1], [], []>} : vector<16x32xbf16>, vector<32x96xbf16>, vector<16x96xf32> -> vector<16x96xf32>
    %219 = arith.index_cast %c1_i32 : i32 to index
    %c0_86 = arith.constant 0 : index
    %c0_87 = arith.constant 0 : index
    %220 = vector.load %arg7[%219, %c0_86, %c0_87] : memref<2x1x96xf32, #tpu.memory_space<vmem>>, vector<1x1x96xf32>
    %221 = vector.shape_cast %220 : vector<1x1x96xf32> to vector<1x96xf32>
    %222 = vector.broadcast %221 : vector<1x96xf32> to vector<16x96xf32>
    %223 = arith.addf %218, %222 : vector<16x96xf32>
    %224 = arith.index_cast %c1_i32 : i32 to index
    %c0_88 = arith.constant 0 : index
    %c0_89 = arith.constant 0 : index
    %225 = vector.load %arg8[%224, %c0_88, %c0_89] : memref<2x32x32xbf16, #tpu.memory_space<vmem>>, vector<1x32x32xbf16>
    %226 = vector.shape_cast %225 : vector<1x32x32xbf16> to vector<32x32xbf16>
    %cst_90 = arith.constant 0.000000e+00 : f32
    %227 = vector.broadcast %cst_90 : f32 to vector<16x32xf32>
    %228 = vector.extract_strided_slice %223 {offsets = [0, 0], sizes = [16, 16], strides = [1, 1]} : vector<16x96xf32> to vector<16x16xf32>
    %229 = arith.truncf %228 : vector<16x16xf32> to vector<16x16xbf16>
    %230 = vector.extract_strided_slice %223 {offsets = [0, 32], sizes = [16, 16], strides = [1, 1]} : vector<16x96xf32> to vector<16x16xf32>
    %231 = arith.truncf %230 : vector<16x16xf32> to vector<16x16xbf16>
    %232 = vector.extract_strided_slice %223 {offsets = [0, 64], sizes = [16, 16], strides = [1, 1]} : vector<16x96xf32> to vector<16x16xf32>
    %233 = arith.truncf %232 : vector<16x16xf32> to vector<16x16xbf16>
    %cst_91 = arith.constant dense<0.000000e+00> : vector<16x16xf32>
    %234 = tpu.matmul %229, %231, %cst_91 {dimension_numbers = #tpu.dot_dimension_numbers<[1], [1], [0], [0], [0, 0, 1, 0], [], []>} : vector<16x16xbf16>, vector<16x16xbf16>, vector<16x16xf32> -> vector<16x16xf32>
    %cst_92 = arith.constant 2.500000e-01 : f32
    %235 = vector.broadcast %cst_92 : f32 to vector<16x16xf32>
    %236 = arith.mulf %234, %235 : vector<16x16xf32>
    %237 = arith.addf %236, %23 : vector<16x16xf32>
    %cst_93 = arith.constant dense<0xFF800000> : vector<16xf32>
    %238 = vector.multi_reduction <maximumf>, %237, %cst_93 [1] : vector<16x16xf32> to vector<16xf32>
    %239 = vector.shape_cast %238 : vector<16xf32> to vector<16x1xf32>
    %240 = vector.broadcast %239 : vector<16x1xf32> to vector<16x16xf32>
    %241 = arith.subf %237, %240 : vector<16x16xf32>
    %242 = math.exp %241 : vector<16x16xf32>
    %cst_94 = arith.constant dense<0.000000e+00> : vector<16xf32>
    %243 = vector.multi_reduction <add>, %242, %cst_94 [1] : vector<16x16xf32> to vector<16xf32>
    %244 = vector.shape_cast %243 : vector<16xf32> to vector<16x1xf32>
    %245 = tpu.reciprocal %244 {approx = true} : vector<16x1xf32> -> vector<16x1xf32>
    %246 = vector.broadcast %245 : vector<16x1xf32> to vector<16x16xf32>
    %247 = arith.mulf %242, %246 : vector<16x16xf32>
    %248 = arith.truncf %247 : vector<16x16xf32> to vector<16x16xbf16>
    %cst_95 = arith.constant dense<0.000000e+00> : vector<16x16xf32>
    %249 = tpu.matmul %248, %233, %cst_95 {dimension_numbers = #tpu.dot_dimension_numbers<[1], [0], [0], [1], [0, 0, 1, 1], [], []>} : vector<16x16xbf16>, vector<16x16xbf16>, vector<16x16xf32> -> vector<16x16xf32>
    %250 = arith.truncf %249 : vector<16x16xf32> to vector<16x16xbf16>
    %251 = vector.extract_strided_slice %226 {offsets = [0, 0], sizes = [16, 32], strides = [1, 1]} : vector<32x32xbf16> to vector<16x32xbf16>
    %cst_96 = arith.constant dense<0.000000e+00> : vector<16x32xf32>
    %252 = tpu.matmul %250, %251, %cst_96 {dimension_numbers = #tpu.dot_dimension_numbers<[1], [0], [0], [1], [0, 0, 1, 1], [], []>} : vector<16x16xbf16>, vector<16x32xbf16>, vector<16x32xf32> -> vector<16x32xf32>
    %253 = arith.addf %227, %252 : vector<16x32xf32>
    %254 = vector.extract_strided_slice %223 {offsets = [0, 16], sizes = [16, 16], strides = [1, 1]} : vector<16x96xf32> to vector<16x16xf32>
    %255 = arith.truncf %254 : vector<16x16xf32> to vector<16x16xbf16>
    %256 = vector.extract_strided_slice %223 {offsets = [0, 48], sizes = [16, 16], strides = [1, 1]} : vector<16x96xf32> to vector<16x16xf32>
    %257 = arith.truncf %256 : vector<16x16xf32> to vector<16x16xbf16>
    %258 = vector.extract_strided_slice %223 {offsets = [0, 80], sizes = [16, 16], strides = [1, 1]} : vector<16x96xf32> to vector<16x16xf32>
    %259 = arith.truncf %258 : vector<16x16xf32> to vector<16x16xbf16>
    %cst_97 = arith.constant dense<0.000000e+00> : vector<16x16xf32>
    %260 = tpu.matmul %255, %257, %cst_97 {dimension_numbers = #tpu.dot_dimension_numbers<[1], [1], [0], [0], [0, 0, 1, 0], [], []>} : vector<16x16xbf16>, vector<16x16xbf16>, vector<16x16xf32> -> vector<16x16xf32>
    %cst_98 = arith.constant 2.500000e-01 : f32
    %261 = vector.broadcast %cst_98 : f32 to vector<16x16xf32>
    %262 = arith.mulf %260, %261 : vector<16x16xf32>
    %263 = arith.addf %262, %23 : vector<16x16xf32>
    %cst_99 = arith.constant dense<0xFF800000> : vector<16xf32>
    %264 = vector.multi_reduction <maximumf>, %263, %cst_99 [1] : vector<16x16xf32> to vector<16xf32>
    %265 = vector.shape_cast %264 : vector<16xf32> to vector<16x1xf32>
    %266 = vector.broadcast %265 : vector<16x1xf32> to vector<16x16xf32>
    %267 = arith.subf %263, %266 : vector<16x16xf32>
    %268 = math.exp %267 : vector<16x16xf32>
    %cst_100 = arith.constant dense<0.000000e+00> : vector<16xf32>
    %269 = vector.multi_reduction <add>, %268, %cst_100 [1] : vector<16x16xf32> to vector<16xf32>
    %270 = vector.shape_cast %269 : vector<16xf32> to vector<16x1xf32>
    %271 = tpu.reciprocal %270 {approx = true} : vector<16x1xf32> -> vector<16x1xf32>
    %272 = vector.broadcast %271 : vector<16x1xf32> to vector<16x16xf32>
    %273 = arith.mulf %268, %272 : vector<16x16xf32>
    %274 = arith.truncf %273 : vector<16x16xf32> to vector<16x16xbf16>
    %cst_101 = arith.constant dense<0.000000e+00> : vector<16x16xf32>
    %275 = tpu.matmul %274, %259, %cst_101 {dimension_numbers = #tpu.dot_dimension_numbers<[1], [0], [0], [1], [0, 0, 1, 1], [], []>} : vector<16x16xbf16>, vector<16x16xbf16>, vector<16x16xf32> -> vector<16x16xf32>
    %276 = arith.truncf %275 : vector<16x16xf32> to vector<16x16xbf16>
    %277 = vector.extract_strided_slice %226 {offsets = [16, 0], sizes = [16, 32], strides = [1, 1]} : vector<32x32xbf16> to vector<16x32xbf16>
    %cst_102 = arith.constant dense<0.000000e+00> : vector<16x32xf32>
    %278 = tpu.matmul %276, %277, %cst_102 {dimension_numbers = #tpu.dot_dimension_numbers<[1], [0], [0], [1], [0, 0, 1, 1], [], []>} : vector<16x16xbf16>, vector<16x32xbf16>, vector<16x32xf32> -> vector<16x32xf32>
    %279 = arith.addf %253, %278 : vector<16x32xf32>
    %280 = arith.addf %185, %279 : vector<16x32xf32>
    %281 = arith.index_cast %c1_i32 : i32 to index
    %c0_103 = arith.constant 0 : index
    %c0_104 = arith.constant 0 : index
    %282 = vector.load %arg9[%281, %c0_103, %c0_104] : memref<2x1x32xf32, #tpu.memory_space<vmem>>, vector<1x1x32xf32>
    %283 = vector.shape_cast %282 : vector<1x1x32xf32> to vector<1x32xf32>
    %284 = vector.broadcast %283 : vector<1x32xf32> to vector<16x32xf32>
    %285 = arith.addf %280, %284 : vector<16x32xf32>
    %286 = arith.index_cast %c1_i32 : i32 to index
    %c0_105 = arith.constant 0 : index
    %c0_106 = arith.constant 0 : index
    %287 = vector.load %arg16[%286, %c0_105, %c0_106] : memref<2x1x32xf32, #tpu.memory_space<vmem>>, vector<1x1x32xf32>
    %288 = vector.shape_cast %287 : vector<1x1x32xf32> to vector<1x32xf32>
    %289 = arith.index_cast %c1_i32 : i32 to index
    %c0_107 = arith.constant 0 : index
    %c0_108 = arith.constant 0 : index
    %290 = vector.load %arg17[%289, %c0_107, %c0_108] : memref<2x1x32xf32, #tpu.memory_space<vmem>>, vector<1x1x32xf32>
    %291 = vector.shape_cast %290 : vector<1x1x32xf32> to vector<1x32xf32>
    %cst_109 = arith.constant dense<0.000000e+00> : vector<16xf32>
    %292 = vector.multi_reduction <add>, %285, %cst_109 [1] : vector<16x32xf32> to vector<16xf32>
    %293 = vector.shape_cast %292 : vector<16xf32> to vector<16x1xf32>
    %cst_110 = arith.constant 3.200000e+01 : f32
    %294 = vector.broadcast %cst_110 : f32 to vector<16x1xf32>
    %295 = arith.divf %293, %294 : vector<16x1xf32>
    %296 = vector.broadcast %295 : vector<16x1xf32> to vector<16x32xf32>
    %297 = arith.subf %285, %296 : vector<16x32xf32>
    %298 = arith.mulf %297, %297 : vector<16x32xf32>
    %cst_111 = arith.constant dense<0.000000e+00> : vector<16xf32>
    %299 = vector.multi_reduction <add>, %298, %cst_111 [1] : vector<16x32xf32> to vector<16xf32>
    %300 = vector.shape_cast %299 : vector<16xf32> to vector<16x1xf32>
    %cst_112 = arith.constant 3.200000e+01 : f32
    %301 = vector.broadcast %cst_112 : f32 to vector<16x1xf32>
    %302 = arith.divf %300, %301 : vector<16x1xf32>
    %303 = vector.broadcast %295 : vector<16x1xf32> to vector<16x32xf32>
    %304 = arith.subf %285, %303 : vector<16x32xf32>
    %cst_113 = arith.constant 9.99999974E-6 : f32
    %305 = vector.broadcast %cst_113 : f32 to vector<16x1xf32>
    %306 = arith.addf %302, %305 : vector<16x1xf32>
    %307 = math.rsqrt %306 : vector<16x1xf32>
    %308 = vector.broadcast %307 : vector<16x1xf32> to vector<16x32xf32>
    %309 = arith.mulf %304, %308 : vector<16x32xf32>
    %310 = vector.broadcast %288 : vector<1x32xf32> to vector<16x32xf32>
    %311 = arith.mulf %309, %310 : vector<16x32xf32>
    %312 = vector.broadcast %291 : vector<1x32xf32> to vector<16x32xf32>
    %313 = arith.addf %311, %312 : vector<16x32xf32>
    %314 = arith.truncf %313 : vector<16x32xf32> to vector<16x32xbf16>
    %315 = arith.index_cast %c1_i32 : i32 to index
    %c0_114 = arith.constant 0 : index
    %c0_115 = arith.constant 0 : index
    %316 = vector.load %arg10[%315, %c0_114, %c0_115] : memref<2x32x128xbf16, #tpu.memory_space<vmem>>, vector<1x32x128xbf16>
    %317 = vector.shape_cast %316 : vector<1x32x128xbf16> to vector<32x128xbf16>
    %cst_116 = arith.constant dense<0.000000e+00> : vector<16x128xf32>
    %318 = tpu.matmul %314, %317, %cst_116 {dimension_numbers = #tpu.dot_dimension_numbers<[1], [0], [0], [1], [0, 0, 1, 1], [], []>} : vector<16x32xbf16>, vector<32x128xbf16>, vector<16x128xf32> -> vector<16x128xf32>
    %319 = arith.index_cast %c1_i32 : i32 to index
    %c0_117 = arith.constant 0 : index
    %c0_118 = arith.constant 0 : index
    %320 = vector.load %arg11[%319, %c0_117, %c0_118] : memref<2x1x128xf32, #tpu.memory_space<vmem>>, vector<1x1x128xf32>
    %321 = vector.shape_cast %320 : vector<1x1x128xf32> to vector<1x128xf32>
    %322 = vector.broadcast %321 : vector<1x128xf32> to vector<16x128xf32>
    %323 = arith.addf %318, %322 : vector<16x128xf32>
    %324 = arith.mulf %323, %323 : vector<16x128xf32>
    %325 = arith.mulf %323, %324 : vector<16x128xf32>
    %cst_119 = arith.constant 4.471500e-02 : f32
    %326 = vector.broadcast %cst_119 : f32 to vector<16x128xf32>
    %327 = arith.mulf %326, %325 : vector<16x128xf32>
    %328 = arith.addf %323, %327 : vector<16x128xf32>
    %cst_120 = arith.constant 0.797884583 : f32
    %329 = vector.broadcast %cst_120 : f32 to vector<16x128xf32>
    %330 = arith.mulf %329, %328 : vector<16x128xf32>
    %331 = math.tanh %330 : vector<16x128xf32>
    %cst_121 = arith.constant 1.000000e+00 : f32
    %332 = vector.broadcast %cst_121 : f32 to vector<16x128xf32>
    %333 = arith.addf %332, %331 : vector<16x128xf32>
    %cst_122 = arith.constant 5.000000e-01 : f32
    %334 = vector.broadcast %cst_122 : f32 to vector<16x128xf32>
    %335 = arith.mulf %334, %333 : vector<16x128xf32>
    %336 = arith.mulf %323, %335 : vector<16x128xf32>
    %337 = arith.truncf %336 : vector<16x128xf32> to vector<16x128xbf16>
    %338 = arith.index_cast %c1_i32 : i32 to index
    %c0_123 = arith.constant 0 : index
    %c0_124 = arith.constant 0 : index
    %339 = vector.load %arg12[%338, %c0_123, %c0_124] : memref<2x128x32xbf16, #tpu.memory_space<vmem>>, vector<1x128x32xbf16>
    %340 = vector.shape_cast %339 : vector<1x128x32xbf16> to vector<128x32xbf16>
    %cst_125 = arith.constant dense<0.000000e+00> : vector<16x32xf32>
    %341 = tpu.matmul %337, %340, %cst_125 {dimension_numbers = #tpu.dot_dimension_numbers<[1], [0], [0], [1], [0, 0, 1, 1], [], []>} : vector<16x128xbf16>, vector<128x32xbf16>, vector<16x32xf32> -> vector<16x32xf32>
    %342 = arith.index_cast %c1_i32 : i32 to index
    %c0_126 = arith.constant 0 : index
    %c0_127 = arith.constant 0 : index
    %343 = vector.load %arg13[%342, %c0_126, %c0_127] : memref<2x1x32xf32, #tpu.memory_space<vmem>>, vector<1x1x32xf32>
    %344 = vector.shape_cast %343 : vector<1x1x32xf32> to vector<1x32xf32>
    %345 = vector.broadcast %344 : vector<1x32xf32> to vector<16x32xf32>
    %346 = arith.addf %341, %345 : vector<16x32xf32>
    %347 = arith.addf %285, %346 : vector<16x32xf32>
    %c2_i32 = arith.constant 2 : i32
    %348 = vector.extract_strided_slice %347 {offsets = [8, 0], sizes = [8, 32], strides = [1, 1]} : vector<16x32xf32> to vector<8x32xf32>
    %c0_128 = arith.constant 0 : index
    %c0_129 = arith.constant 0 : index
    %c0_130 = arith.constant 0 : index
    %349 = vector.load %arg18[%c0_128, %c0_129, %c0_130] : memref<1x8x32xf32, #tpu.memory_space<vmem>>, vector<1x8x32xf32>
    %350 = vector.shape_cast %349 : vector<1x8x32xf32> to vector<8x32xf32>
    %351 = vector.shape_cast %348 : vector<8x32xf32> to vector<1x8x32xf32>
    tpu.vector_store %arg18[%c0_128, %c0_129, %c0_130], %351 {strides = array<i32>} : memref<1x8x32xf32, #tpu.memory_space<vmem>>, vector<1x8x32xf32>,
    return
  }
  func.func @transform_0(%arg0: i32) -> (i32, i32, i32) {
    %c0_i32 = arith.constant 0 : i32
    %c0_i32_0 = arith.constant 0 : i32
    %c0_i32_1 = arith.constant 0 : i32
    return %arg0, %c0_i32, %c0_i32_0 : i32, i32, i32
  }
  func.func @transform_1(%arg0: i32) -> (i32, i32, i32) {
    %c0_i32 = arith.constant 0 : i32
    %c0_i32_0 = arith.constant 0 : i32
    %c0_i32_1 = arith.constant 0 : i32
    return %arg0, %c0_i32, %c0_i32_0 : i32, i32, i32
  }
  func.func @transform_2(%arg0: i32) -> (i32, i32, i32) {
    %c0_i32 = arith.constant 0 : i32
    %c0_i32_0 = arith.constant 0 : i32
    %c0_i32_1 = arith.constant 0 : i32
    return %arg0, %c0_i32, %c0_i32_0 : i32, i32, i32
  }
  func.func @transform_3(%arg0: i32) -> (i32, i32) {
    %c0_i32 = arith.constant 0 : i32
    %c0_i32_0 = arith.constant 0 : i32
    %c0_i32_1 = arith.constant 0 : i32
    return %c0_i32, %c0_i32_0 : i32, i32
  }
  func.func @transform_4(%arg0: i32) -> (i32, i32) {
    %c0_i32 = arith.constant 0 : i32
    %c0_i32_0 = arith.constant 0 : i32
    %c0_i32_1 = arith.constant 0 : i32
    return %c0_i32, %c0_i32_0 : i32, i32
  }
  func.func @transform_5(%arg0: i32) -> (i32, i32, i32) {
    %c0_i32 = arith.constant 0 : i32
    %c0_i32_0 = arith.constant 0 : i32
    %c0_i32_1 = arith.constant 0 : i32
    %c0_i32_2 = arith.constant 0 : i32
    return %c0_i32, %c0_i32_0, %c0_i32_1 : i32, i32, i32
  }
  func.func @transform_6(%arg0: i32) -> (i32, i32, i32) {
    %c0_i32 = arith.constant 0 : i32
    %c0_i32_0 = arith.constant 0 : i32
    %c0_i32_1 = arith.constant 0 : i32
    %c0_i32_2 = arith.constant 0 : i32
    return %c0_i32, %c0_i32_0, %c0_i32_1 : i32, i32, i32
  }
  func.func @transform_7(%arg0: i32) -> (i32, i32, i32) {
    %c0_i32 = arith.constant 0 : i32
    %c0_i32_0 = arith.constant 0 : i32
    %c0_i32_1 = arith.constant 0 : i32
    %c0_i32_2 = arith.constant 0 : i32
    return %c0_i32, %c0_i32_0, %c0_i32_1 : i32, i32, i32
  }
  func.func @transform_8(%arg0: i32) -> (i32, i32, i32) {
    %c0_i32 = arith.constant 0 : i32
    %c0_i32_0 = arith.constant 0 : i32
    %c0_i32_1 = arith.constant 0 : i32
    %c0_i32_2 = arith.constant 0 : i32
    return %c0_i32, %c0_i32_0, %c0_i32_1 : i32, i32, i32
  }
  func.func @transform_9(%arg0: i32) -> (i32, i32, i32) {
    %c0_i32 = arith.constant 0 : i32
    %c0_i32_0 = arith.constant 0 : i32
    %c0_i32_1 = arith.constant 0 : i32
    %c0_i32_2 = arith.constant 0 : i32
    return %c0_i32, %c0_i32_0, %c0_i32_1 : i32, i32, i32
  }
  func.func @transform_10(%arg0: i32) -> (i32, i32, i32) {
    %c0_i32 = arith.constant 0 : i32
    %c0_i32_0 = arith.constant 0 : i32
    %c0_i32_1 = arith.constant 0 : i32
    %c0_i32_2 = arith.constant 0 : i32
    return %c0_i32, %c0_i32_0, %c0_i32_1 : i32, i32, i32
  }
  func.func @transform_11(%arg0: i32) -> (i32, i32, i32) {
    %c0_i32 = arith.constant 0 : i32
    %c0_i32_0 = arith.constant 0 : i32
    %c0_i32_1 = arith.constant 0 : i32
    %c0_i32_2 = arith.constant 0 : i32
    return %c0_i32, %c0_i32_0, %c0_i32_1 : i32, i32, i32
  }
  func.func @transform_12(%arg0: i32) -> (i32, i32, i32) {
    %c0_i32 = arith.constant 0 : i32
    %c0_i32_0 = arith.constant 0 : i32
    %c0_i32_1 = arith.constant 0 : i32
    %c0_i32_2 = arith.constant 0 : i32
    return %c0_i32, %c0_i32_0, %c0_i32_1 : i32, i32, i32
  }
  func.func @transform_13(%arg0: i32) -> (i32, i32, i32) {
    %c0_i32 = arith.constant 0 : i32
    %c0_i32_0 = arith.constant 0 : i32
    %c0_i32_1 = arith.constant 0 : i32
    %c0_i32_2 = arith.constant 0 : i32
    return %c0_i32, %c0_i32_0, %c0_i32_1 : i32, i32, i32
  }
  func.func @transform_14(%arg0: i32) -> (i32, i32, i32) {
    %c0_i32 = arith.constant 0 : i32
    %c0_i32_0 = arith.constant 0 : i32
    %c0_i32_1 = arith.constant 0 : i32
    %c0_i32_2 = arith.constant 0 : i32
    return %c0_i32, %c0_i32_0, %c0_i32_1 : i32, i32, i32
  }
  func.func @transform_15(%arg0: i32) -> (i32, i32, i32) {
    %c0_i32 = arith.constant 0 : i32
    %c0_i32_0 = arith.constant 0 : i32
    %c0_i32_1 = arith.constant 0 : i32
    %c0_i32_2 = arith.constant 0 : i32
    return %c0_i32, %c0_i32_0, %c0_i32_1 : i32, i32, i32
  }
  func.func @transform_16(%arg0: i32) -> (i32, i32, i32) {
    %c0_i32 = arith.constant 0 : i32
    %c0_i32_0 = arith.constant 0 : i32
    %c0_i32_1 = arith.constant 0 : i32
    %c0_i32_2 = arith.constant 0 : i32
    return %c0_i32, %c0_i32_0, %c0_i32_1 : i32, i32, i32
  }
  func.func @transform_17(%arg0: i32) -> (i32, i32, i32) {
    %c0_i32 = arith.constant 0 : i32
    %c0_i32_0 = arith.constant 0 : i32
    %c0_i32_1 = arith.constant 0 : i32
    return %arg0, %c0_i32, %c0_i32_0 : i32, i32, i32
  }
}

</mosaic_0001>

<llo_original>
// kernel: phi_compressor_forward.1
$region0: #{phi_compressor_forward.1}
  #allocation0 [shape = 'u32[]', space=smem, size = 0x4, offset = 0x4, fixed_abs, tag = 'smem constant byte address 0x4 - core index']
  #allocation1 [shape = 'u32[144,128]{1,0:T(1,128)}', space=vmem, size = 0x12000, scoped, tag = 'internal scratch']
  #allocation2 [shape = 'f32[16,32]{1,0:T(8,128)}', space=vmem, size = 0x2000, scoped, tag = 'scratch operand']
  %s0 = inlined_call_operand.vmem [shape: bf16[2,8,256], index: 0, kind: input, shape index: {}]
  %s1 = inlined_call_operand.vmem [shape: f32[2,8,32], index: 1, kind: input, shape index: {}]
  %s2 = inlined_call_operand.vmem [shape: f32[2,1,16], index: 2, kind: input, shape index: {}]
  %s3 = inlined_call_operand.vmem [shape: bf16[256,32], index: 3, kind: input, shape index: {}]
  %s4 = inlined_call_operand.vmem [shape: f32[1,32], index: 4, kind: input, shape index: {}]
  %s5 = inlined_call_operand.vmem [shape: bf16[2,32,96], index: 5, kind: input, shape index: {}]
  %s6 = inlined_call_operand.vmem [shape: f32[2,1,96], index: 6, kind: input, shape index: {}]
  %s7 = inlined_call_operand.vmem [shape: bf16[2,32,32], index: 7, kind: input, shape index: {}]
  %s8 = inlined_call_operand.vmem [shape: f32[2,1,32], index: 8, kind: input, shape index: {}]
  %s9 = inlined_call_operand.vmem [shape: bf16[2,32,128], index: 9, kind: input, shape index: {}]
  %s10 = inlined_call_operand.vmem [shape: f32[2,1,128], index: 10, kind: input, shape index: {}]
  %s11 = inlined_call_operand.vmem [shape: bf16[2,128,32], index: 11, kind: input, shape index: {}]
  %s12 = inlined_call_operand.vmem [shape: f32[2,1,32], index: 12, kind: input, shape index: {}]
  %s13 = inlined_call_operand.vmem [shape: f32[2,1,32], index: 13, kind: input, shape index: {}]
  %s14 = inlined_call_operand.vmem [shape: f32[2,1,32], index: 14, kind: input, shape index: {}]
  %s15 = inlined_call_operand.vmem [shape: f32[2,1,32], index: 15, kind: input, shape index: {}]
  %s16 = inlined_call_operand.vmem [shape: f32[2,1,32], index: 16, kind: input, shape index: {}]
  %s17 = inlined_call_operand.vmem [shape: f32[2,8,32], index: 17, kind: output, shape index: {}]
  %s18 = sld [smem:[#allocation0]]
  $region101: #{phi_compressor_forward.1} parent=0
    _
  %s20 = ssub.s32 1, %s18
  %s21 = scalar_select 0, %s20, %s18
  loop: start=0, step=1, limit=4
  $region2: #{phi_compressor_forward.1} parent=0 // loop_pre_header
    _
  $region3: #{phi_compressor_forward.1} parent=0 // loop_header
    %s23 = sphi 0, %s27
    %p24 = scmp.ge.s32.totalorder %s23, 4
    %s33 = sphi 0, %s35
    %s36 = sphi 0, %s33
    %s37 = sphi 0, %s36
    %s53 = sphi 0, %s37
    %s59 = sphi 0, %s61
    %s62 = sphi 0, %s59
    %s63 = sphi 0, %s62
    %s79 = sphi 0, %s63
    %s85 = sphi 0, %s87
    %s88 = sphi 0, %s85
    %s89 = sphi 0, %s88
    %s105 = sphi 0, %s89
    %s109 = sphi 0, %s109
    %s111 = sphi 0, %s109
    %s112 = sphi 0, %s111
    %s126 = sphi 0, %s112
    %s130 = sphi 0, %s130
    %s132 = sphi 0, %s130
    %s133 = sphi 0, %s132
    %s147 = sphi 0, %s133
    %s151 = sphi 0, %s151
    %s153 = sphi 0, %s151
    %s154 = sphi 0, %s153
    %s168 = sphi 0, %s154
    %s172 = sphi 0, %s172
    %s174 = sphi 0, %s172
    %s175 = sphi 0, %s174
    %s189 = sphi 0, %s175
    %s193 = sphi 0, %s193
    %s195 = sphi 0, %s193
    %s196 = sphi 0, %s195
    %s210 = sphi 0, %s196
    %s214 = sphi 0, %s214
    %s216 = sphi 0, %s214
    %s217 = sphi 0, %s216
    %s231 = sphi 0, %s217
    %s235 = sphi 0, %s235
    %s237 = sphi 0, %s235
    %s238 = sphi 0, %s237
    %s252 = sphi 0, %s238
    %s256 = sphi 0, %s256
    %s258 = sphi 0, %s256
    %s259 = sphi 0, %s258
    %s273 = sphi 0, %s259
    %s277 = sphi 0, %s277
    %s279 = sphi 0, %s277
    %s280 = sphi 0, %s279
    %s294 = sphi 0, %s280
    %s298 = sphi 0, %s298
    %s300 = sphi 0, %s298
    %s301 = sphi 0, %s300
    %s315 = sphi 0, %s301
    %s319 = sphi 0, %s319
    %s321 = sphi 0, %s319
    %s322 = sphi 0, %s321
    %s336 = sphi 0, %s322
    %s340 = sphi 0, %s340
    %s342 = sphi 0, %s340
    %s343 = sphi 0, %s342
    %s357 = sphi 0, %s343
    %s361 = sphi 0, %s361
    %s363 = sphi 0, %s361
    %s364 = sphi 0, %s363
    %s378 = sphi 0, %s364
    %s382 = sphi 0, %s382
    %s384 = sphi 0, %s382
    %s385 = sphi 0, %s384
    %s399 = sphi 0, %s385
    %s405 = sphi 0, %s407
    %s408 = sphi 0, %s405
    %s409 = sphi 0, %s408
    %s425 = sphi 0, %s409
  $region4: #{phi_compressor_forward.1} parent=0 // loop_header_branch
    %26 = sbr.rel (%p24) target = $region8
  $region5: #{phi_compressor_forward.1} parent=0 // loop_body
    %s28 = ssub.s32 %s23, 1
    %s29 = ssub.s32 %s23, 2
    %s30 = sadd.s32 %s23, 1
    %s31 = ssub.s32 %s23, %s30
    %p32 = scmp.eq.s32.totalorder %s31, 0
    %s34 = sadd.s32 %s33, 1
    %s35 = scalar_select %p32, %s33, %s34
    %p38 = pneg %p32
    %p39 = scmp.eq.s32.totalorder %s23, 1
    %p40 = por %p38, %p39
    %p41 = scmp.ne.s32.totalorder %s33, %s36
    %p42 = scmp.eq.s32.totalorder %s23, 0
    %p43 = por %p41, %p42
    %p44 = scmp.ne.s32.totalorder %s33, %s36
    %p45 = scmp.eq.s32.totalorder %s28, 1
    %p46 = por %p44, %p45
    %p47 = scmp.ne.s32.totalorder %s36, %s37
    %p48 = scmp.eq.s32.totalorder %s28, 0
    %p49 = por %p47, %p48
    %p50 = scmp.ne.s32.totalorder %s36, %s37
    %p51 = scmp.eq.s32.totalorder %s29, 1
    %p52 = por %p50, %p51
    %p54 = scmp.ne.s32.totalorder %s37, %s53
    %p55 = scmp.eq.s32.totalorder %s29, 0
    %p56 = por %p54, %p55
    %s57 = ssub.s32 %s23, %s30
    %p58 = scmp.eq.s32.totalorder %s57, 0
    %s60 = sadd.s32 %s59, 1
    %s61 = scalar_select %p58, %s59, %s60
    %p64 = pneg %p58
    %p65 = scmp.eq.s32.totalorder %s23, 1
    %p66 = por %p64, %p65
    %p67 = scmp.ne.s32.totalorder %s59, %s62
    %p68 = scmp.eq.s32.totalorder %s23, 0
    %p69 = por %p67, %p68
    %p70 = scmp.ne.s32.totalorder %s59, %s62
    %p71 = scmp.eq.s32.totalorder %s28, 1
    %p72 = por %p70, %p71
    %p73 = scmp.ne.s32.totalorder %s62, %s63
    %p74 = scmp.eq.s32.totalorder %s28, 0
    %p75 = por %p73, %p74
    %p76 = scmp.ne.s32.totalorder %s62, %s63
    %p77 = scmp.eq.s32.totalorder %s29, 1
    %p78 = por %p76, %p77
    %p80 = scmp.ne.s32.totalorder %s63, %s79
    %p81 = scmp.eq.s32.totalorder %s29, 0
    %p82 = por %p80, %p81
    %s83 = ssub.s32 %s23, %s30
    %p84 = scmp.eq.s32.totalorder %s83, 0
    %s86 = sadd.s32 %s85, 1
    %s87 = scalar_select %p84, %s85, %s86
    %p90 = pneg %p84
    %p91 = scmp.eq.s32.totalorder %s23, 1
    %p92 = por %p90, %p91
    %p93 = scmp.ne.s32.totalorder %s85, %s88
    %p94 = scmp.eq.s32.totalorder %s23, 0
    %p95 = por %p93, %p94
    %p96 = scmp.ne.s32.totalorder %s85, %s88
    %p97 = scmp.eq.s32.totalorder %s28, 1
    %p98 = por %p96, %p97
    %p99 = scmp.ne.s32.totalorder %s88, %s89
    %p100 = scmp.eq.s32.totalorder %s28, 0
    %p101 = por %p99, %p100
    %p102 = scmp.ne.s32.totalorder %s88, %s89
    %p103 = scmp.eq.s32.totalorder %s29, 1
    %p104 = por %p102, %p103
    %p106 = scmp.ne.s32.totalorder %s89, %s105
    %p107 = scmp.eq.s32.totalorder %s29, 0
    %p108 = por %p106, %p107
    %s110 = sadd.s32 %s109, 1
    %p113 = scmp.eq.s32.totalorder %s23, 1
    %p114 = scmp.ne.s32.totalorder %s109, %s111
    %p115 = scmp.eq.s32.totalorder %s23, 0
    %p116 = por %p114, %p115
    %p117 = scmp.ne.s32.totalorder %s109, %s111
    %p118 = scmp.eq.s32.totalorder %s28, 1
    %p119 = por %p117, %p118
    %p120 = scmp.ne.s32.totalorder %s111, %s112
    %p121 = scmp.eq.s32.totalorder %s28, 0
    %p122 = por %p120, %p121
    %p123 = scmp.ne.s32.totalorder %s111, %s112
    %p124 = scmp.eq.s32.totalorder %s29, 1
    %p125 = por %p123, %p124
    %p127 = scmp.ne.s32.totalorder %s112, %s126
    %p128 = scmp.eq.s32.totalorder %s29, 0
    %p129 = por %p127, %p128
    %s131 = sadd.s32 %s130, 1
    %p134 = scmp.eq.s32.totalorder %s23, 1
    %p135 = scmp.ne.s32.totalorder %s130, %s132
    %p136 = scmp.eq.s32.totalorder %s23, 0
    %p137 = por %p135, %p136
    %p138 = scmp.ne.s32.totalorder %s130, %s132
    %p139 = scmp.eq.s32.totalorder %s28, 1
    %p140 = por %p138, %p139
    %p141 = scmp.ne.s32.totalorder %s132, %s133
    %p142 = scmp.eq.s32.totalorder %s28, 0
    %p143 = por %p141, %p142
    %p144 = scmp.ne.s32.totalorder %s132, %s133
    %p145 = scmp.eq.s32.totalorder %s29, 1
    %p146 = por %p144, %p145
    %p148 = scmp.ne.s32.totalorder %s133, %s147
    %p149 = scmp.eq.s32.totalorder %s29, 0
    %p150 = por %p148, %p149
    %s152 = sadd.s32 %s151, 1
    %p155 = scmp.eq.s32.totalorder %s23, 1
    %p156 = scmp.ne.s32.totalorder %s151, %s153
    %p157 = scmp.eq.s32.totalorder %s23, 0
    %p158 = por %p156, %p157
    %p159 = scmp.ne.s32.totalorder %s151, %s153
    %p160 = scmp.eq.s32.totalorder %s28, 1
    %p161 = por %p159, %p160
    %p162 = scmp.ne.s32.totalorder %s153, %s154
    %p163 = scmp.eq.s32.totalorder %s28, 0
    %p164 = por %p162, %p163
    %p165 = scmp.ne.s32.totalorder %s153, %s154
    %p166 = scmp.eq.s32.totalorder %s29, 1
    %p167 = por %p165, %p166
    %p169 = scmp.ne.s32.totalorder %s154, %s168
    %p170 = scmp.eq.s32.totalorder %s29, 0
    %p171 = por %p169, %p170
    %s173 = sadd.s32 %s172, 1
    %p176 = scmp.eq.s32.totalorder %s23, 1
    %p177 = scmp.ne.s32.totalorder %s172, %s174
    %p178 = scmp.eq.s32.totalorder %s23, 0
    %p179 = por %p177, %p178
    %p180 = scmp.ne.s32.totalorder %s172, %s174
    %p181 = scmp.eq.s32.totalorder %s28, 1
    %p182 = por %p180, %p181
    %p183 = scmp.ne.s32.totalorder %s174, %s175
    %p184 = scmp.eq.s32.totalorder %s28, 0
    %p185 = por %p183, %p184
    %p186 = scmp.ne.s32.totalorder %s174, %s175
    %p187 = scmp.eq.s32.totalorder %s29, 1
    %p188 = por %p186, %p187
    %p190 = scmp.ne.s32.totalorder %s175, %s189
    %p191 = scmp.eq.s32.totalorder %s29, 0
    %p192 = por %p190, %p191
    %s194 = sadd.s32 %s193, 1
    %p197 = scmp.eq.s32.totalorder %s23, 1
    %p198 = scmp.ne.s32.totalorder %s193, %s195
    %p199 = scmp.eq.s32.totalorder %s23, 0
    %p200 = por %p198, %p199
    %p201 = scmp.ne.s32.totalorder %s193, %s195
    %p202 = scmp.eq.s32.totalorder %s28, 1
    %p203 = por %p201, %p202
    %p204 = scmp.ne.s32.totalorder %s195, %s196
    %p205 = scmp.eq.s32.totalorder %s28, 0
    %p206 = por %p204, %p205
    %p207 = scmp.ne.s32.totalorder %s195, %s196
    %p208 = scmp.eq.s32.totalorder %s29, 1
    %p209 = por %p207, %p208
    %p211 = scmp.ne.s32.totalorder %s196, %s210
    %p212 = scmp.eq.s32.totalorder %s29, 0
    %p213 = por %p211, %p212
    %s215 = sadd.s32 %s214, 1
    %p218 = scmp.eq.s32.totalorder %s23, 1
    %p219 = scmp.ne.s32.totalorder %s214, %s216
    %p220 = scmp.eq.s32.totalorder %s23, 0
    %p221 = por %p219, %p220
    %p222 = scmp.ne.s32.totalorder %s214, %s216
    %p223 = scmp.eq.s32.totalorder %s28, 1
    %p224 = por %p222, %p223
    %p225 = scmp.ne.s32.totalorder %s216, %s217
    %p226 = scmp.eq.s32.totalorder %s28, 0
    %p227 = por %p225, %p226
    %p228 = scmp.ne.s32.totalorder %s216, %s217
    %p229 = scmp.eq.s32.totalorder %s29, 1
    %p230 = por %p228, %p229
    %p232 = scmp.ne.s32.totalorder %s217, %s231
    %p233 = scmp.eq.s32.totalorder %s29, 0
    %p234 = por %p232, %p233
    %s236 = sadd.s32 %s235, 1
    %p239 = scmp.eq.s32.totalorder %s23, 1
    %p240 = scmp.ne.s32.totalorder %s235, %s237
    %p241 = scmp.eq.s32.totalorder %s23, 0
    %p242 = por %p240, %p241
    %p243 = scmp.ne.s32.totalorder %s235, %s237
    %p244 = scmp.eq.s32.totalorder %s28, 1
    %p245 = por %p243, %p244
    %p246 = scmp.ne.s32.totalorder %s237, %s238
    %p247 = scmp.eq.s32.totalorder %s28, 0
    %p248 = por %p246, %p247
    %p249 = scmp.ne.s32.totalorder %s237, %s238
    %p250 = scmp.eq.s32.totalorder %s29, 1
    %p251 = por %p249, %p250
    %p253 = scmp.ne.s32.totalorder %s238, %s252
    %p254 = scmp.eq.s32.totalorder %s29, 0
    %p255 = por %p253, %p254
    %s257 = sadd.s32 %s256, 1
    %p260 = scmp.eq.s32.totalorder %s23, 1
    %p261 = scmp.ne.s32.totalorder %s256, %s258
    %p262 = scmp.eq.s32.totalorder %s23, 0
    %p263 = por %p261, %p262
    %p264 = scmp.ne.s32.totalorder %s256, %s258
    %p265 = scmp.eq.s32.totalorder %s28, 1
    %p266 = por %p264, %p265
    %p267 = scmp.ne.s32.totalorder %s258, %s259
    %p268 = scmp.eq.s32.totalorder %s28, 0
    %p269 = por %p267, %p268
    %p270 = scmp.ne.s32.totalorder %s258, %s259
    %p271 = scmp.eq.s32.totalorder %s29, 1
    %p272 = por %p270, %p271
    %p274 = scmp.ne.s32.totalorder %s259, %s273
    %p275 = scmp.eq.s32.totalorder %s29, 0
    %p276 = por %p274, %p275
    %s278 = sadd.s32 %s277, 1
    %p281 = scmp.eq.s32.totalorder %s23, 1
    %p282 = scmp.ne.s32.totalorder %s277, %s279
    %p283 = scmp.eq.s32.totalorder %s23, 0
    %p284 = por %p282, %p283
    %p285 = scmp.ne.s32.totalorder %s277, %s279
    %p286 = scmp.eq.s32.totalorder %s28, 1
    %p287 = por %p285, %p286
    %p288 = scmp.ne.s32.totalorder %s279, %s280
    %p289 = scmp.eq.s32.totalorder %s28, 0
    %p290 = por %p288, %p289
    %p291 = scmp.ne.s32.totalorder %s279, %s280
    %p292 = scmp.eq.s32.totalorder %s29, 1
    %p293 = por %p291, %p292
    %p295 = scmp.ne.s32.totalorder %s280, %s294
    %p296 = scmp.eq.s32.totalorder %s29, 0
    %p297 = por %p295, %p296
    %s299 = sadd.s32 %s298, 1
    %p302 = scmp.eq.s32.totalorder %s23, 1
    %p303 = scmp.ne.s32.totalorder %s298, %s300
    %p304 = scmp.eq.s32.totalorder %s23, 0
    %p305 = por %p303, %p304
    %p306 = scmp.ne.s32.totalorder %s298, %s300
    %p307 = scmp.eq.s32.totalorder %s28, 1
    %p308 = por %p306, %p307
    %p309 = scmp.ne.s32.totalorder %s300, %s301
    %p310 = scmp.eq.s32.totalorder %s28, 0
    %p311 = por %p309, %p310
    %p312 = scmp.ne.s32.totalorder %s300, %s301
    %p313 = scmp.eq.s32.totalorder %s29, 1
    %p314 = por %p312, %p313
    %p316 = scmp.ne.s32.totalorder %s301, %s315
    %p317 = scmp.eq.s32.totalorder %s29, 0
    %p318 = por %p316, %p317
    %s320 = sadd.s32 %s319, 1
    %p323 = scmp.eq.s32.totalorder %s23, 1
    %p324 = scmp.ne.s32.totalorder %s319, %s321
    %p325 = scmp.eq.s32.totalorder %s23, 0
    %p326 = por %p324, %p325
    %p327 = scmp.ne.s32.totalorder %s319, %s321
    %p328 = scmp.eq.s32.totalorder %s28, 1
    %p329 = por %p327, %p328
    %p330 = scmp.ne.s32.totalorder %s321, %s322
    %p331 = scmp.eq.s32.totalorder %s28, 0
    %p332 = por %p330, %p331
    %p333 = scmp.ne.s32.totalorder %s321, %s322
    %p334 = scmp.eq.s32.totalorder %s29, 1
    %p335 = por %p333, %p334
    %p337 = scmp.ne.s32.totalorder %s322, %s336
    %p338 = scmp.eq.s32.totalorder %s29, 0
    %p339 = por %p337, %p338
    %s341 = sadd.s32 %s340, 1
    %p344 = scmp.eq.s32.totalorder %s23, 1
    %p345 = scmp.ne.s32.totalorder %s340, %s342
    %p346 = scmp.eq.s32.totalorder %s23, 0
    %p347 = por %p345, %p346
    %p348 = scmp.ne.s32.totalorder %s340, %s342
    %p349 = scmp.eq.s32.totalorder %s28, 1
    %p350 = por %p348, %p349
    %p351 = scmp.ne.s32.totalorder %s342, %s343
    %p352 = scmp.eq.s32.totalorder %s28, 0
    %p353 = por %p351, %p352
    %p354 = scmp.ne.s32.totalorder %s342, %s343
    %p355 = scmp.eq.s32.totalorder %s29, 1
    %p356 = por %p354, %p355
    %p358 = scmp.ne.s32.totalorder %s343, %s357
    %p359 = scmp.eq.s32.totalorder %s29, 0
    %p360 = por %p358, %p359
    %s362 = sadd.s32 %s361, 1
    %p365 = scmp.eq.s32.totalorder %s23, 1
    %p366 = scmp.ne.s32.totalorder %s361, %s363
    %p367 = scmp.eq.s32.totalorder %s23, 0
    %p368 = por %p366, %p367
    %p369 = scmp.ne.s32.totalorder %s361, %s363
    %p370 = scmp.eq.s32.totalorder %s28, 1
    %p371 = por %p369, %p370
    %p372 = scmp.ne.s32.totalorder %s363, %s364
    %p373 = scmp.eq.s32.totalorder %s28, 0
    %p374 = por %p372, %p373
    %p375 = scmp.ne.s32.totalorder %s363, %s364
    %p376 = scmp.eq.s32.totalorder %s29, 1
    %p377 = por %p375, %p376
    %p379 = scmp.ne.s32.totalorder %s364, %s378
    %p380 = scmp.eq.s32.totalorder %s29, 0
    %p381 = por %p379, %p380
    %s383 = sadd.s32 %s382, 1
    %p386 = scmp.eq.s32.totalorder %s23, 1
    %p387 = scmp.ne.s32.totalorder %s382, %s384
    %p388 = scmp.eq.s32.totalorder %s23, 0
    %p389 = por %p387, %p388
    %p390 = scmp.ne.s32.totalorder %s382, %s384
    %p391 = scmp.eq.s32.totalorder %s28, 1
    %p392 = por %p390, %p391
    %p393 = scmp.ne.s32.totalorder %s384, %s385
    %p394 = scmp.eq.s32.totalorder %s28, 0
    %p395 = por %p393, %p394
    %p396 = scmp.ne.s32.totalorder %s384, %s385
    %p397 = scmp.eq.s32.totalorder %s29, 1
    %p398 = por %p396, %p397
    %p400 = scmp.ne.s32.totalorder %s385, %s399
    %p401 = scmp.eq.s32.totalorder %s29, 0
    %p402 = por %p400, %p401
    %s403 = ssub.s32 %s23, %s30
    %p404 = scmp.eq.s32.totalorder %s403, 0
    %s406 = sadd.s32 %s405, 1
    %s407 = scalar_select %p404, %s405, %s406
    %p410 = pneg %p404
    %p411 = scmp.eq.s32.totalorder %s23, 1
    %p412 = por %p410, %p411
    %p413 = scmp.ne.s32.totalorder %s405, %s408
    %p414 = scmp.eq.s32.totalorder %s23, 0
    %p415 = por %p413, %p414
    %p416 = scmp.ne.s32.totalorder %s405, %s408
    %p417 = scmp.eq.s32.totalorder %s28, 1
    %p418 = por %p416, %p417
    %p419 = scmp.ne.s32.totalorder %s408, %s409
    %p420 = scmp.eq.s32.totalorder %s28, 0
    %p421 = por %p419, %p420
    %p422 = scmp.ne.s32.totalorder %s408, %s409
    %p423 = scmp.eq.s32.totalorder %s29, 1
    %p424 = por %p422, %p423
    %p426 = scmp.ne.s32.totalorder %s409, %s425
    %p427 = scmp.eq.s32.totalorder %s29, 0
    %p428 = por %p426, %p427
    %p429 = scmp.le.s32.totalorder 1, %s23
    %p430 = scmp.lt.s32.totalorder %s23, 3
    %p431 = pnand %p429, %p430
    %p432 = pneg %p431
    // Predicated region
    $region9: #{phi_compressor_forward.1} parent=5 // pred_check
      _
    $region10: #{phi_compressor_forward.1} parent=5 // pred_check_branch
      %434 = sbr.rel (%p431) target = $region12
    $region11: #{phi_compressor_forward.1} parent=5 // pred_region
      %s435 = ssub.s32 %s23, 1
      // Predicated region
      $region13: #{phi_compressor_forward.1} parent=11 // pred_check
        %p436 = pneg %p122
      $region14: #{phi_compressor_forward.1} parent=11 // pred_check_branch
        %438 = sbr.rel (%p436) target = $region16
      $region15: #{phi_compressor_forward.1} parent=11 // pred_region
        _
      $region16: #{phi_compressor_forward.1} parent=11 // pred_fallthru
        _
      // Predicated region
      $region17: #{phi_compressor_forward.1} parent=11 // pred_check
        %p439 = pneg %p143
      $region18: #{phi_compressor_forward.1} parent=11 // pred_check_branch
        %441 = sbr.rel (%p439) target = $region20
      $region19: #{phi_compressor_forward.1} parent=11 // pred_region
        _
      $region20: #{phi_compressor_forward.1} parent=11 // pred_fallthru
        _
      // Predicated region
      $region21: #{phi_compressor_forward.1} parent=11 // pred_check
        %p442 = pneg %p164
      $region22: #{phi_compressor_forward.1} parent=11 // pred_check_branch
        %444 = sbr.rel (%p442) target = $region24
      $region23: #{phi_compressor_forward.1} parent=11 // pred_region
        _
      $region24: #{phi_compressor_forward.1} parent=11 // pred_fallthru
        _
      // Predicated region
      $region25: #{phi_compressor_forward.1} parent=11 // pred_check
        %p445 = pneg %p185
      $region26: #{phi_compressor_forward.1} parent=11 // pred_check_branch
        %447 = sbr.rel (%p445) target = $region28
      $region27: #{phi_compressor_forward.1} parent=11 // pred_region
        _
      $region28: #{phi_compressor_forward.1} parent=11 // pred_fallthru
        _
      // Predicated region
      $region29: #{phi_compressor_forward.1} parent=11 // pred_check
        %p448 = pneg %p206
      $region30: #{phi_compressor_forward.1} parent=11 // pred_check_branch
        %450 = sbr.rel (%p448) target = $region32
      $region31: #{phi_compressor_forward.1} parent=11 // pred_region
        _
      $region32: #{phi_compressor_forward.1} parent=11 // pred_fallthru
        _
      // Predicated region
      $region33: #{phi_compressor_forward.1} parent=11 // pred_check
        %p451 = pneg %p227
      $region34: #{phi_compressor_forward.1} parent=11 // pred_check_branch
        %453 = sbr.rel (%p451) target = $region36
      $region35: #{phi_compressor_forward.1} parent=11 // pred_region
        _
      $region36: #{phi_compressor_forward.1} parent=11 // pred_fallthru
        _
      // Predicated region
      $region37: #{phi_compressor_forward.1} parent=11 // pred_check
        %p454 = pneg %p248
      $region38: #{phi_compressor_forward.1} parent=11 // pred_check_branch
        %456 = sbr.rel (%p454) target = $region40
      $region39: #{phi_compressor_forward.1} parent=11 // pred_region
        _
      $region40: #{phi_compressor_forward.1} parent=11 // pred_fallthru
        _
      // Predicated region
      $region41: #{phi_compressor_forward.1} parent=11 // pred_check
        %p457 = pneg %p269
      $region42: #{phi_compressor_forward.1} parent=11 // pred_check_branch
        %459 = sbr.rel (%p457) target = $region44
      $region43: #{phi_compressor_forward.1} parent=11 // pred_region
        _
      $region44: #{phi_compressor_forward.1} parent=11 // pred_fallthru
        _
      // Predicated region
      $region45: #{phi_compressor_forward.1} parent=11 // pred_check
        %p460 = pneg %p290
      $region46: #{phi_compressor_forward.1} parent=11 // pred_check_branch
        %462 = sbr.rel (%p460) target = $region48
      $region47: #{phi_compressor_forward.1} parent=11 // pred_region
        _
      $region48: #{phi_compressor_forward.1} parent=11 // pred_fallthru
        _
      // Predicated region
      $region49: #{phi_compressor_forward.1} parent=11 // pred_check
        %p463 = pneg %p311
      $region50: #{phi_compressor_forward.1} parent=11 // pred_check_branch
        %465 = sbr.rel (%p463) target = $region52
      $region51: #{phi_compressor_forward.1} parent=11 // pred_region
        _
      $region52: #{phi_compressor_forward.1} parent=11 // pred_fallthru
        _
      // Predicated region
      $region53: #{phi_compressor_forward.1} parent=11 // pred_check
        %p466 = pneg %p332
      $region54: #{phi_compressor_forward.1} parent=11 // pred_check_branch
        %468 = sbr.rel (%p466) target = $region56
      $region55: #{phi_compressor_forward.1} parent=11 // pred_region
        _
      $region56: #{phi_compressor_forward.1} parent=11 // pred_fallthru
        _
      // Predicated region
      $region57: #{phi_compressor_forward.1} parent=11 // pred_check
        %p469 = pneg %p353
      $region58: #{phi_compressor_forward.1} parent=11 // pred_check_branch
        %471 = sbr.rel (%p469) target = $region60
      $region59: #{phi_compressor_forward.1} parent=11 // pred_region
        _
      $region60: #{phi_compressor_forward.1} parent=11 // pred_fallthru
        _
      // Predicated region
      $region61: #{phi_compressor_forward.1} parent=11 // pred_check
        %p472 = pneg %p374
      $region62: #{phi_compressor_forward.1} parent=11 // pred_check_branch
        %474 = sbr.rel (%p472) target = $region64
      $region63: #{phi_compressor_forward.1} parent=11 // pred_region
        _
      $region64: #{phi_compressor_forward.1} parent=11 // pred_fallthru
        _
      // Predicated region
      $region65: #{phi_compressor_forward.1} parent=11 // pred_check
        %p475 = pneg %p395
      $region66: #{phi_compressor_forward.1} parent=11 // pred_check_branch
        %477 = sbr.rel (%p475) target = $region68
      $region67: #{phi_compressor_forward.1} parent=11 // pred_region
        _
      $region68: #{phi_compressor_forward.1} parent=11 // pred_fallthru
        _
    $region12: #{phi_compressor_forward.1} parent=5 // pred_fallthru
      _
    %p478 = scmp.lt.s32.totalorder %s23, 2
    // Predicated region
    $region69: #{phi_compressor_forward.1} parent=5 // pred_check
      %p479 = pneg %p478
    $region70: #{phi_compressor_forward.1} parent=5 // pred_check_branch
      %481 = sbr.rel (%p479) target = $region72
    $region71: #{phi_compressor_forward.1} parent=5 // pred_region
      // Predicated region
      $region73: #{phi_compressor_forward.1} parent=71 // pred_check
        %p482 = pneg %p43
      $region74: #{phi_compressor_forward.1} parent=71 // pred_check_branch
        %484 = sbr.rel (%p482) target = $region76
      $region75: #{phi_compressor_forward.1} parent=71 // pred_region
        %p485 = scmp.lt.s32.totalorder %s23, 1
        %s486 = scalar_select %p485, %s23, 1
        %s487 = smul.addr %s486, 2
        %s488 = smul.addr %s487, 4
        %s489 = scalar_lea.vmem %s0, %s488
      $region76: #{phi_compressor_forward.1} parent=71 // pred_fallthru
        _
      // Predicated region
      $region77: #{phi_compressor_forward.1} parent=71 // pred_check
        %p490 = pneg %p69
      $region78: #{phi_compressor_forward.1} parent=71 // pred_check_branch
        %492 = sbr.rel (%p490) target = $region80
      $region79: #{phi_compressor_forward.1} parent=71 // pred_region
        %p493 = scmp.lt.s32.totalorder %s23, 1
        %s494 = scalar_select %p493, %s23, 1
        %s495 = smul.addr %s494, 8
        %s496 = scalar_lea.vmem %s1, %s495
      $region80: #{phi_compressor_forward.1} parent=71 // pred_fallthru
        _
      // Predicated region
      $region81: #{phi_compressor_forward.1} parent=71 // pred_check
        %p497 = pneg %p95
      $region82: #{phi_compressor_forward.1} parent=71 // pred_check_branch
        %499 = sbr.rel (%p497) target = $region84
      $region83: #{phi_compressor_forward.1} parent=71 // pred_region
        %p500 = scmp.lt.s32.totalorder %s23, 1
        %s501 = scalar_select %p500, %s23, 1
        %s502 = scalar_lea.vmem %s2, %s501
      $region84: #{phi_compressor_forward.1} parent=71 // pred_fallthru
        _
    $region72: #{phi_compressor_forward.1} parent=5 // pred_fallthru
      _
    %p503 = scmp.le.s32.totalorder 1, %s23
    %p504 = scmp.lt.s32.totalorder %s23, 3
    %p505 = pnand %p503, %p504
    %p506 = pneg %p505
    // Predicated region
    $region85: #{phi_compressor_forward.1} parent=5 // pred_check
      _
    $region86: #{phi_compressor_forward.1} parent=5 // pred_check_branch
      %508 = sbr.rel (%p505) target = $region88
    $region87: #{phi_compressor_forward.1} parent=5 // pred_region
      %s509 = ssub.s32 %s23, 1
      %p510 = scmp.lt.s32.totalorder %s28, 1
      %s511 = scalar_select %p510, %s28, 1
      %s512 = smul.addr %s511, 2
      %s513 = smul.addr %s512, 4
      %s514 = scalar_lea.vmem %s0, %s513
      %p515 = pneg %p49
      %p516 = pneg %p46
      %p517 = scmp.lt.s32.totalorder %s28, 1
      %s518 = scalar_select %p517, %s28, 1
      %s519 = smul.addr %s518, 8
      %s520 = scalar_lea.vmem %s1, %s519
      %p521 = pneg %p75
      %p522 = pneg %p72
      %p523 = scmp.lt.s32.totalorder %s28, 1
      %s524 = scalar_select %p523, %s28, 1
      %s525 = scalar_lea.vmem %s2, %s524
      %p526 = pneg %p101
      %p527 = pneg %p98
      %p528 = pneg %p122
      %p529 = pneg %p119
      %p530 = pneg %p143
      %p531 = pneg %p140
      %p532 = pneg %p164
      %p533 = pneg %p161
      %p534 = pneg %p185
      %p535 = pneg %p182
      %p536 = pneg %p206
      %p537 = pneg %p203
      %p538 = pneg %p227
      %p539 = pneg %p224
      %p540 = pneg %p248
      %p541 = pneg %p245
      %p542 = pneg %p269
      %p543 = pneg %p266
      %p544 = pneg %p290
      %p545 = pneg %p287
      %p546 = pneg %p311
      %p547 = pneg %p308
      %p548 = pneg %p332
      %p549 = pneg %p329
      %p550 = pneg %p353
      %p551 = pneg %p350
      %p552 = pneg %p374
      %p553 = pneg %p371
      %p554 = pneg %p395
      %p555 = pneg %p392
      %p556 = pneg %p421
      %p557 = pneg %p418
      %p558 = scmp.lt.s32.totalorder %s28, 1
      %s559 = scalar_select %p558, %s28, 1
      %s560 = smul.addr %s559, 8
      %s561 = scalar_lea.vmem %s17, %s560
      %p562 = scmp.lt.s32.totalorder %s28, 1
      %s563 = scalar_select %p562, %s28, 1
      %s564 = smul.addr %s563, 2
      %s565 = smul.addr %s564, 4
      %s566 = scalar_lea.vmem %s0, %s565
      %p567 = scmp.lt.s32.totalorder %s28, 1
      %s568 = scalar_select %p567, %s28, 1
      %s569 = smul.addr %s568, 8
      %s570 = scalar_lea.vmem %s1, %s569
      %p571 = scmp.lt.s32.totalorder %s28, 1
      %s572 = scalar_select %p571, %s28, 1
      %s573 = scalar_lea.vmem %s2, %s572
      %p574 = scmp.lt.s32.totalorder %s28, 1
      %s575 = scalar_select %p574, %s28, 1
      %s576 = smul.addr %s575, 8
      %s577 = scalar_lea.vmem %s17, %s576
      %v579 = vld [vmem:[%s566] sm:$0xff]
      %v580 = vld [vmem:[%s3] sm:$0xf]
      %v581 = vld [vmem:[%s3 + $0x4] sm:$0xf]
      %v582 = vld [vmem:[%s3 + $0x8] sm:$0xf]
      %v583 = vld [vmem:[%s3 + $0xc] sm:$0xf]
      %v584 = vld [vmem:[%s3 + $0x10] sm:$0xf]
      %v585 = vld [vmem:[%s3 + $0x14] sm:$0xf]
      %v586 = vld [vmem:[%s3 + $0x18] sm:$0xf]
      %v587 = vld [vmem:[%s3 + $0x1c] sm:$0xf]
      %v588 = vld [vmem:[%s3 + $0x20] sm:$0xf]
      %v589 = vld [vmem:[%s3 + $0x24] sm:$0xf]
      %v590 = vld [vmem:[%s3 + $0x28] sm:$0xf]
      %v591 = vld [vmem:[%s3 + $0x2c] sm:$0xf]
      %v592 = vld [vmem:[%s3 + $0x30] sm:$0xf]
      %v593 = vld [vmem:[%s3 + $0x34] sm:$0xf]
      %v594 = vld [vmem:[%s3 + $0x38] sm:$0xf]
      %v595 = vld [vmem:[%s3 + $0x3c] sm:$0xf]
      %v596 = vld [vmem:[%s3 + $0x40] sm:$0xf]
      %v597 = vld [vmem:[%s3 + $0x44] sm:$0xf]
      %v598 = vld [vmem:[%s3 + $0x48] sm:$0xf]
      %v599 = vld [vmem:[%s3 + $0x4c] sm:$0xf]
      %v600 = vld [vmem:[%s3 + $0x50] sm:$0xf]
      %v601 = vld [vmem:[%s3 + $0x54] sm:$0xf]
      %v602 = vld [vmem:[%s3 + $0x58] sm:$0xf]
      %v603 = vld [vmem:[%s3 + $0x5c] sm:$0xf]
      %v604 = vld [vmem:[%s3 + $0x60] sm:$0xf]
      %v605 = vld [vmem:[%s3 + $0x64] sm:$0xf]
      %v606 = vld [vmem:[%s3 + $0x68] sm:$0xf]
      %v607 = vld [vmem:[%s3 + $0x6c] sm:$0xf]
      %v608 = vld [vmem:[%s3 + $0x70] sm:$0xf]
      %v609 = vld [vmem:[%s3 + $0x74] sm:$0xf]
      %v610 = vld [vmem:[%s3 + $0x78] sm:$0xf]
      %v611 = vld [vmem:[%s3 + $0x7c] sm:$0xf]
      %v612 = vld [vmem:[%s4] sm:$0x1]
      %v614 = vlaneseq
      %v615 = vshrl.u32 %v614, 7
      %v616 = vsub.s32 0, %v615
      %v617 = vrot.slane %v612, %v616
      %v620 = vunpack.c.l.b16 %v579
      %v621 = vunpack.c.h.b16 %v579
      %v622 = vpack.c.b16 %v620, %v620
      %v623 = vpack.c.b16 %v621, %v621
      %v658 = vunpack.c.l.b16 %v580
      %v659 = vunpack.c.l.b16 %v581
      %v660 = vunpack.c.l.b16 %v582
      %v661 = vunpack.c.l.b16 %v583
      %v662 = vunpack.c.l.b16 %v584
      %v663 = vunpack.c.l.b16 %v585
      %v664 = vunpack.c.l.b16 %v586
      %v665 = vunpack.c.l.b16 %v587
      %v666 = vunpack.c.l.b16 %v588
      %v667 = vunpack.c.l.b16 %v589
      %v668 = vunpack.c.l.b16 %v590
      %v669 = vunpack.c.l.b16 %v591
      %v670 = vunpack.c.l.b16 %v592
      %v671 = vunpack.c.l.b16 %v593
      %v672 = vunpack.c.l.b16 %v594
      %v673 = vunpack.c.l.b16 %v595
      %v674 = vunpack.c.l.b16 %v596
      %v675 = vunpack.c.l.b16 %v597
      %v676 = vunpack.c.l.b16 %v598
      %v677 = vunpack.c.l.b16 %v599
      %v678 = vunpack.c.l.b16 %v600
      %v679 = vunpack.c.l.b16 %v601
      %v680 = vunpack.c.l.b16 %v602
      %v681 = vunpack.c.l.b16 %v603
      %v682 = vunpack.c.l.b16 %v604
      %v683 = vunpack.c.l.b16 %v605
      %v684 = vunpack.c.l.b16 %v606
      %v685 = vunpack.c.l.b16 %v607
      %v686 = vunpack.c.l.b16 %v608
      %v687 = vunpack.c.l.b16 %v609
      %v688 = vunpack.c.l.b16 %v610
      %v689 = vunpack.c.l.b16 %v611
      %v690 = vpack.c.b16 %v659, %v658
      %v691 = vpack.c.b16 %v661, %v660
      %v692 = vpack.c.b16 %v663, %v662
      %v693 = vpack.c.b16 %v665, %v664
      %v694 = vpack.c.b16 %v667, %v666
      %v695 = vpack.c.b16 %v669, %v668
      %v696 = vpack.c.b16 %v671, %v670
      %v697 = vpack.c.b16 %v673, %v672
      %v698 = vpack.c.b16 %v675, %v674
      %v699 = vpack.c.b16 %v677, %v676
      %v700 = vpack.c.b16 %v679, %v678
      %v701 = vpack.c.b16 %v681, %v680
      %v702 = vpack.c.b16 %v683, %v682
      %v703 = vpack.c.b16 %v685, %v684
      %v704 = vpack.c.b16 %v687, %v686
      %v705 = vpack.c.b16 %v689, %v688
      %722 = vmatprep.subr.bf16.mxu0 0
      %723 = vmatpush1.bf16.msra.mxu0 %v690
      %724 = vmatprep.subr.bf16.mxu0 0
      %725 = vmatpush1.bf16.msra.mxu0 %v691
      %726 = vmatprep.subr.bf16.mxu0 0
      %727 = vmatpush1.bf16.msra.mxu0 %v692
      %728 = vmatprep.subr.bf16.mxu0 0
      %729 = vmatpush1.bf16.msra.mxu0 %v693
      %730 = vmatprep.subr.bf16.mxu0 0
      %731 = vmatpush1.bf16.msra.mxu0 %v694
      %732 = vmatprep.subr.bf16.mxu0 0
      %733 = vmatpush1.bf16.msra.mxu0 %v695
      %734 = vmatprep.subr.bf16.mxu0 0
      %735 = vmatpush1.bf16.msra.mxu0 %v696
      %736 = vmatprep.subr.bf16.mxu0 0
      %737 = vmatpush1.bf16.msra.mxu0 %v697
      %738 = vmatprep.subr.bf16.mxu0 0
      %739 = vmatpush1.bf16.msra.mxu0 %v698
      %740 = vmatprep.subr.bf16.mxu0 0
      %741 = vmatpush1.bf16.msra.mxu0 %v699
      %742 = vmatprep.subr.bf16.mxu0 0
      %743 = vmatpush1.bf16.msra.mxu0 %v700
      %744 = vmatprep.subr.bf16.mxu0 0
      %745 = vmatpush1.bf16.msra.mxu0 %v701
      %746 = vmatprep.subr.bf16.mxu0 0
      %747 = vmatpush1.bf16.msra.mxu0 %v702
      %748 = vmatprep.subr.bf16.mxu0 0
      %749 = vmatpush1.bf16.msra.mxu0 %v703
      %750 = vmatprep.subr.bf16.mxu0 0
      %751 = vmatpush1.bf16.msra.mxu0 %v704
      %752 = vmatprep.subr.bf16.mxu0 0
      %753 = vmatpush1.bf16.msra.mxu0 %v705
      %754 = vmatprep.mubr.bf16.mxu0 %v623
      %755 = vmatmul.mubr.bf16.gmra.mrb[0].mxu0 %v622
      %v756 = vpop.f32.mrb[0].mxu0
      %v757 = vadd.f32 %v617, %v756
      %v758 = vpop.f32.mrb[0].mxu0
      %v759 = vpop.f32.mrb[0].mxu0
      %v760 = vpop.f32.mrb[0].mxu0
      %761 = vdwg.mxu0
      %vm762 = vcmask 261120
      %763 = vst.msk [vmem:[#allocation2] sm:$0xff] %vm762, %v757
      %v764 = vld [vmem:[%s570] sm:$0xff]
      %765 = vst.msk [vmem:[#allocation2 + $0x8] sm:$0xff] %vm762, %v764
      %v766 = vld [vmem:[#allocation2] sm:$0xff]
      %v767 = vld [vmem:[#allocation2 + $0x8] sm:$0xff]
      %v768 = vlaneseq
      %v769 = vshrl.u32 %v768, 7
      %v770 = vadd.s32 %v769, 8
      %v771 = vlaneseq
      %v772 = vand.u32 %v771, 127
      %vm773 = vcmp.ge.s32.totalorder %v769, %v772
      %vm774 = vcmp.ge.s32.totalorder %v770, %v772
      %v775 = vld [vmem:[%s573] sm:$0x1]
      %vm776 = vcmp.gt.f32.partialorder %v775, 0.5
      %v777 = vsel %vm776, 1, 0
      %v778 = vlaneseq
      %v779 = vshrl.u32 %v778, 7
      %v780 = vsub.s32 0, %v779
      %v781 = vrot.slane %v777, %v780
      %vm782 = vcmp.eq.s32.totalorder %v781, 1
      %vm783 = vmand %vm773, %vm782
      %vm784 = vmand %vm774, %vm782
      %v785 = vsel %vm783, 0.0, -1e+09
      %v786 = vsel %vm784, 0.0, -1e+09
      %v787 = vld [vmem:[%s13] sm:$0x1]
      %v788 = vld [vmem:[%s14] sm:$0x1]
      %v789 = vsel %vm762, %v766, 0.0
      %790 = vadd.xlane.f32.xlu0 %v789
      %v791 = vpop.xlane.xlu0 %790
      %v792 = vsel %vm762, %v767, 0.0
      %793 = vadd.xlane.f32.xlu0 %v792
      %v794 = vpop.xlane.xlu0 %793
      %v795 = vrcp.pop 32.0
      %v796 = vmul.f32 %v791, %v795
      %v797 = vmul.f32 %v794, %v795
      %v798 = vsub.f32 %v766, %v796
      %v799 = vsub.f32 %v767, %v797
      %v800 = vmul.f32 %v798, %v798
      %v801 = vmul.f32 %v799, %v799
      %v802 = vsel %vm762, %v800, 0.0
      %803 = vadd.xlane.f32.xlu0 %v802
      %v804 = vpop.xlane.xlu0 %803
      %v805 = vsel %vm762, %v801, 0.0
      %806 = vadd.xlane.f32.xlu0 %v805
      %v807 = vpop.xlane.xlu0 %806
      %v808 = vmul.f32 %v804, %v795
      %v809 = vmul.f32 %v807, %v795
      %v810 = vadd.f32 %v808, 1e-05
      %v811 = vadd.f32 %v809, 1e-05
      %v812 = vrsqrt.pop %v810
      %v813 = vrsqrt.pop %v811
      %v814 = vmul.f32 %v798, %v812
      %v815 = vmul.f32 %v799, %v813
      %v817 = vlaneseq
      %v818 = vshrl.u32 %v817, 7
      %v819 = vsub.s32 0, %v818
      %v820 = vrot.slane %v787, %v819
      %v822 = vmul.f32 %v814, %v820
      %v823 = vmul.f32 %v815, %v820
      %v825 = vlaneseq
      %v826 = vshrl.u32 %v825, 7
      %v827 = vsub.s32 0, %v826
      %v828 = vrot.slane %v788, %v827
      %v830 = vadd.f32 %v822, %v828
      %v831 = vadd.f32 %v823, %v828
      %v832 = vpack.c.bf16 %v831, %v830
      %v833 = vld [vmem:[%s5] sm:$0xf]
      %v834 = vld [vmem:[%s5 + $0x4] sm:$0xf]
      %v835 = vld [vmem:[%s5 + $0x8] sm:$0xf]
      %v836 = vld [vmem:[%s5 + $0xc] sm:$0xf]
      %v837 = vld [vmem:[%s6] sm:$0x1]
      %v839 = vlaneseq
      %v840 = vshrl.u32 %v839, 7
      %v841 = vsub.s32 0, %v840
      %v842 = vrot.slane %v837, %v841
      %v848 = vunpack.c.l.b16 %v833
      %v849 = vunpack.c.l.b16 %v834
      %v850 = vunpack.c.l.b16 %v835
      %v851 = vunpack.c.l.b16 %v836
      %v852 = vpack.c.b16 %v849, %v848
      %v853 = vpack.c.b16 %v851, %v850
      %v857 = vsel %vm762, %v832, 0
      %859 = vmatprep.subr.bf16.mxu0 0
      %860 = vmatpush1.bf16.msra.mxu0 %v852
      %861 = vmatprep.subr.bf16.mxu0 0
      %862 = vmatpush1.bf16.msra.mxu0 %v853
      %863 = vmatprep.subr.bf16.mxu0 0
      %864 = vmatpush1.bf16.msra.mxu0 0
      %865 = vmatprep.subr.bf16.mxu0 0
      %866 = vmatpush1.bf16.msra.mxu0 0
      %867 = vmatprep.subr.bf16.mxu0 0
      %868 = vmatpush1.bf16.msra.mxu0 0
      %869 = vmatprep.subr.bf16.mxu0 0
      %870 = vmatpush1.bf16.msra.mxu0 0
      %871 = vmatprep.subr.bf16.mxu0 0
      %872 = vmatpush1.bf16.msra.mxu0 0
      %873 = vmatprep.subr.bf16.mxu0 0
      %874 = vmatpush1.bf16.msra.mxu0 0
      %875 = vmatprep.subr.bf16.mxu0 0
      %876 = vmatpush1.bf16.msra.mxu0 0
      %877 = vmatprep.subr.bf16.mxu0 0
      %878 = vmatpush1.bf16.msra.mxu0 0
      %879 = vmatprep.subr.bf16.mxu0 0
      %880 = vmatpush1.bf16.msra.mxu0 0
      %881 = vmatprep.subr.bf16.mxu0 0
      %882 = vmatpush1.bf16.msra.mxu0 0
      %883 = vmatprep.subr.bf16.mxu0 0
      %884 = vmatpush1.bf16.msra.mxu0 0
      %885 = vmatprep.subr.bf16.mxu0 0
      %886 = vmatpush1.bf16.msra.mxu0 0
      %887 = vmatprep.subr.bf16.mxu0 0
      %888 = vmatpush1.bf16.msra.mxu0 0
      %889 = vmatprep.subr.bf16.mxu0 0
      %890 = vmatpush1.bf16.msra.mxu0 0
      %891 = vmatprep.mubr.bf16.mxu0 0
      %892 = vmatmul.mubr.bf16.gmra.mrb[0].mxu0 %v857
      %v893 = vpop.f32.mrb[0].mxu0
      %v894 = vadd.f32 %v842, %v893
      %v895 = vpop.f32.mrb[0].mxu0
      %v896 = vpop.f32.mrb[0].mxu0
      %v897 = vadd.f32 %v842, %v896
      %v898 = vpop.f32.mrb[0].mxu0
      %899 = vdwg.mxu0
      %v900 = vld [vmem:[%s7] sm:$0xf]
      %v901 = vld [vmem:[%s7 + $0x4] sm:$0xf]
      %v902 = vld [vmem:[%s7 + $0x8] sm:$0xf]
      %v903 = vld [vmem:[%s7 + $0xc] sm:$0xf]
      %v904 = vpack.c.bf16 %v897, %v894
      %906 = vrot.lane.b32.xlu0 %v904, 96
      %v907 = vpop.permute.xlu0 %906
      %vm908 = vcmask 130048
      %v910 = vsel %vm908, %v904, 0
      %v913 = vsel %vm908, %v907, 0
      %915 = vmatprep.subr.bf16.mxu0 0
      %916 = vmatpush1.bf16.xpose.msra.mxu0 %v913
      %917 = vmatprep.subr.bf16.mxu0 0
      %918 = vmatpush1.bf16.xpose.msra.mxu0 0
      %919 = vmatprep.subr.bf16.mxu0 0
      %920 = vmatpush1.bf16.xpose.msra.mxu0 0
      %921 = vmatprep.subr.bf16.mxu0 0
      %922 = vmatpush1.bf16.xpose.msra.mxu0 0
      %923 = vmatprep.subr.bf16.mxu0 0
      %924 = vmatpush1.bf16.xpose.msra.mxu0 0
      %925 = vmatprep.subr.bf16.mxu0 0
      %926 = vmatpush1.bf16.xpose.msra.mxu0 0
      %927 = vmatprep.subr.bf16.mxu0 0
      %928 = vmatpush1.bf16.xpose.msra.mxu0 0
      %929 = vmatprep.subr.bf16.mxu0 0
      %930 = vmatpush1.bf16.xpose.msra.mxu0 0
      %931 = vmatprep.subr.bf16.mxu0 0
      %932 = vmatpush1.bf16.xpose.msra.mxu0 0
      %933 = vmatprep.subr.bf16.mxu0 0
      %934 = vmatpush1.bf16.xpose.msra.mxu0 0
      %935 = vmatprep.subr.bf16.mxu0 0
      %936 = vmatpush1.bf16.xpose.msra.mxu0 0
      %937 = vmatprep.subr.bf16.mxu0 0
      %938 = vmatpush1.bf16.xpose.msra.mxu0 0
      %939 = vmatprep.subr.bf16.mxu0 0
      %940 = vmatpush1.bf16.xpose.msra.mxu0 0
      %941 = vmatprep.subr.bf16.mxu0 0
      %942 = vmatpush1.bf16.xpose.msra.mxu0 0
      %943 = vmatprep.subr.bf16.mxu0 0
      %944 = vmatpush1.bf16.xpose.msra.mxu0 0
      %945 = vmatprep.subr.bf16.mxu0 0
      %946 = vmatpush1.bf16.xpose.msra.mxu0 0
      %947 = vmatprep.mubr.bf16.mxu0 0
      %948 = vmatmul.mubr.bf16.gmra.mrb[0].mxu0 %v910
      %v949 = vpop.f32.mrb[0].mxu0
      %v950 = vadd.f32 0.0, %v949
      %v951 = vpop.f32.mrb[0].mxu0
      %v952 = vpop.f32.mrb[0].mxu0
      %v953 = vadd.f32 0.0, %v952
      %v954 = vpop.f32.mrb[0].mxu0
      %955 = vdwg.mxu0
      %v956 = vmul.f32 %v950, 0.25
      %v957 = vmul.f32 %v953, 0.25
      %v958 = vadd.f32 %v956, %v785
      %v959 = vadd.f32 %v957, %v786
      %v960 = vsel %vm908, %v958, -inf
      %961 = vmax.xlane.f32.xlu0 %v960
      %v962 = vpop.xlane.xlu0 %961
      %v963 = vsel %vm908, %v959, -inf
      %964 = vmax.xlane.f32.xlu0 %v963
      %v965 = vpop.xlane.xlu0 %964
      %v966 = vsub.f32 %v958, %v962
      %v967 = vsub.f32 %v959, %v965
      %v968 = vmul.f32 %v966, 1.442695
      %v969 = vpow.pop %v968
      %v970 = vmul.f32 %v967, 1.442695
      %v971 = vpow.pop %v970
      %v972 = vsel %vm908, %v969, 0.0
      %973 = vadd.xlane.f32.xlu0 %v972
      %v974 = vpop.xlane.xlu0 %973
      %v975 = vsel %vm908, %v971, 0.0
      %976 = vadd.xlane.f32.xlu0 %v975
      %v977 = vpop.xlane.xlu0 %976
      %v978 = vrcp.pop %v974
      %v979 = vrcp.pop %v977
      %v980 = vmul.f32 %v969, %v978
      %v981 = vmul.f32 %v971, %v979
      %v982 = vpack.c.bf16 %v981, %v980
      %983 = vrot.lane.b32.xlu0 %v904, 64
      %v984 = vpop.permute.xlu0 %983
      %v987 = vsel %vm908, %v982, 0
      %989 = vmatprep.subr.bf16.mxu0 0
      %990 = vmatpush1.bf16.msra.mxu0 %v984
      %991 = vmatprep.subr.bf16.mxu0 0
      %992 = vmatpush1.bf16.msra.mxu0 0
      %993 = vmatprep.subr.bf16.mxu0 0
      %994 = vmatpush1.bf16.msra.mxu0 0
      %995 = vmatprep.subr.bf16.mxu0 0
      %996 = vmatpush1.bf16.msra.mxu0 0
      %997 = vmatprep.subr.bf16.mxu0 0
      %998 = vmatpush1.bf16.msra.mxu0 0
      %999 = vmatprep.subr.bf16.mxu0 0
      %1000 = vmatpush1.bf16.msra.mxu0 0
      %1001 = vmatprep.subr.bf16.mxu0 0
      %1002 = vmatpush1.bf16.msra.mxu0 0
      %1003 = vmatprep.subr.bf16.mxu0 0
      %1004 = vmatpush1.bf16.msra.mxu0 0
      %1005 = vmatprep.subr.bf16.mxu0 0
      %1006 = vmatpush1.bf16.msra.mxu0 0
      %1007 = vmatprep.subr.bf16.mxu0 0
      %1008 = vmatpush1.bf16.msra.mxu0 0
      %1009 = vmatprep.subr.bf16.mxu0 0
      %1010 = vmatpush1.bf16.msra.mxu0 0
      %1011 = vmatprep.subr.bf16.mxu0 0
      %1012 = vmatpush1.bf16.msra.mxu0 0
      %1013 = vmatprep.subr.bf16.mxu0 0
      %1014 = vmatpush1.bf16.msra.mxu0 0
      %1015 = vmatprep.subr.bf16.mxu0 0
      %1016 = vmatpush1.bf16.msra.mxu0 0
      %1017 = vmatprep.subr.bf16.mxu0 0
      %1018 = vmatpush1.bf16.msra.mxu0 0
      %1019 = vmatprep.subr.bf16.mxu0 0
      %1020 = vmatpush1.bf16.msra.mxu0 0
      %1021 = vmatprep.mubr.bf16.mxu0 0
      %1022 = vmatmul.mubr.bf16.gmra.mrb[0].mxu0 %v987
      %v1023 = vpop.f32.mrb[0].mxu0
      %v1024 = vadd.f32 0.0, %v1023
      %v1025 = vpop.f32.mrb[0].mxu0
      %v1026 = vpop.f32.mrb[0].mxu0
      %v1027 = vadd.f32 0.0, %v1026
      %v1028 = vpop.f32.mrb[0].mxu0
      %1029 = vdwg.mxu0
      %v1030 = vpack.c.bf16 %v1027, %v1024
      %1031 = vrot.lane.b32.xlu0 %v904, 112
      %v1032 = vpop.permute.xlu0 %1031
      %1033 = vrot.lane.b32.xlu0 %v904, 80
      %v1034 = vpop.permute.xlu0 %1033
      %v1036 = vsel %vm908, %v1032, 0
      %v1039 = vsel %vm908, %v1034, 0
      %1041 = vmatprep.subr.bf16.mxu0 0
      %1042 = vmatpush1.bf16.xpose.msra.mxu0 %v1039
      %1043 = vmatprep.subr.bf16.mxu0 0
      %1044 = vmatpush1.bf16.xpose.msra.mxu0 0
      %1045 = vmatprep.subr.bf16.mxu0 0
      %1046 = vmatpush1.bf16.xpose.msra.mxu0 0
      %1047 = vmatprep.subr.bf16.mxu0 0
      %1048 = vmatpush1.bf16.xpose.msra.mxu0 0
      %1049 = vmatprep.subr.bf16.mxu0 0
      %1050 = vmatpush1.bf16.xpose.msra.mxu0 0
      %1051 = vmatprep.subr.bf16.mxu0 0
      %1052 = vmatpush1.bf16.xpose.msra.mxu0 0
      %1053 = vmatprep.subr.bf16.mxu0 0
      %1054 = vmatpush1.bf16.xpose.msra.mxu0 0
      %1055 = vmatprep.subr.bf16.mxu0 0
      %1056 = vmatpush1.bf16.xpose.msra.mxu0 0
      %1057 = vmatprep.subr.bf16.mxu0 0
      %1058 = vmatpush1.bf16.xpose.msra.mxu0 0
      %1059 = vmatprep.subr.bf16.mxu0 0
      %1060 = vmatpush1.bf16.xpose.msra.mxu0 0
      %1061 = vmatprep.subr.bf16.mxu0 0
      %1062 = vmatpush1.bf16.xpose.msra.mxu0 0
      %1063 = vmatprep.subr.bf16.mxu0 0
      %1064 = vmatpush1.bf16.xpose.msra.mxu0 0
      %1065 = vmatprep.subr.bf16.mxu0 0
      %1066 = vmatpush1.bf16.xpose.msra.mxu0 0
      %1067 = vmatprep.subr.bf16.mxu0 0
      %1068 = vmatpush1.bf16.xpose.msra.mxu0 0
      %1069 = vmatprep.subr.bf16.mxu0 0
      %1070 = vmatpush1.bf16.xpose.msra.mxu0 0
      %1071 = vmatprep.subr.bf16.mxu0 0
      %1072 = vmatpush1.bf16.xpose.msra.mxu0 0
      %1073 = vmatprep.mubr.bf16.mxu0 0
      %1074 = vmatmul.mubr.bf16.gmra.mrb[0].mxu0 %v1036
      %v1075 = vpop.f32.mrb[0].mxu0
      %v1076 = vadd.f32 0.0, %v1075
      %v1077 = vpop.f32.mrb[0].mxu0
      %v1078 = vpop.f32.mrb[0].mxu0
      %v1079 = vadd.f32 0.0, %v1078
      %v1080 = vpop.f32.mrb[0].mxu0
      %1081 = vdwg.mxu0
      %v1082 = vmul.f32 %v1076, 0.25
      %v1083 = vmul.f32 %v1079, 0.25
      %v1084 = vadd.f32 %v1082, %v785
      %v1085 = vadd.f32 %v1083, %v786
      %v1086 = vsel %vm908, %v1084, -inf
      %1087 = vmax.xlane.f32.xlu0 %v1086
      %v1088 = vpop.xlane.xlu0 %1087
      %v1089 = vsel %vm908, %v1085, -inf
      %1090 = vmax.xlane.f32.xlu0 %v1089
      %v1091 = vpop.xlane.xlu0 %1090
      %v1092 = vsub.f32 %v1084, %v1088
      %v1093 = vsub.f32 %v1085, %v1091
      %v1094 = vmul.f32 %v1092, 1.442695
      %v1095 = vpow.pop %v1094
      %v1096 = vmul.f32 %v1093, 1.442695
      %v1097 = vpow.pop %v1096
      %v1098 = vsel %vm908, %v1095, 0.0
      %1099 = vadd.xlane.f32.xlu0 %v1098
      %v1100 = vpop.xlane.xlu0 %1099
      %v1101 = vsel %vm908, %v1097, 0.0
      %1102 = vadd.xlane.f32.xlu0 %v1101
      %v1103 = vpop.xlane.xlu0 %1102
      %v1104 = vrcp.pop %v1100
      %v1105 = vrcp.pop %v1103
      %v1106 = vmul.f32 %v1095, %v1104
      %v1107 = vmul.f32 %v1097, %v1105
      %v1108 = vpack.c.bf16 %v1107, %v1106
      %1109 = vrot.lane.b32.xlu0 %v904, 48
      %v1110 = vpop.permute.xlu0 %1109
      %v1113 = vsel %vm908, %v1108, 0
      %1115 = vmatprep.subr.bf16.mxu0 0
      %1116 = vmatpush1.bf16.msra.mxu0 %v1110
      %1117 = vmatprep.subr.bf16.mxu0 0
      %1118 = vmatpush1.bf16.msra.mxu0 0
      %1119 = vmatprep.subr.bf16.mxu0 0
      %1120 = vmatpush1.bf16.msra.mxu0 0
      %1121 = vmatprep.subr.bf16.mxu0 0
      %1122 = vmatpush1.bf16.msra.mxu0 0
      %1123 = vmatprep.subr.bf16.mxu0 0
      %1124 = vmatpush1.bf16.msra.mxu0 0
      %1125 = vmatprep.subr.bf16.mxu0 0
      %1126 = vmatpush1.bf16.msra.mxu0 0
      %1127 = vmatprep.subr.bf16.mxu0 0
      %1128 = vmatpush1.bf16.msra.mxu0 0
      %1129 = vmatprep.subr.bf16.mxu0 0
      %1130 = vmatpush1.bf16.msra.mxu0 0
      %1131 = vmatprep.subr.bf16.mxu0 0
      %1132 = vmatpush1.bf16.msra.mxu0 0
      %1133 = vmatprep.subr.bf16.mxu0 0
      %1134 = vmatpush1.bf16.msra.mxu0 0
      %1135 = vmatprep.subr.bf16.mxu0 0
      %1136 = vmatpush1.bf16.msra.mxu0 0
      %1137 = vmatprep.subr.bf16.mxu0 0
      %1138 = vmatpush1.bf16.msra.mxu0 0
      %1139 = vmatprep.subr.bf16.mxu0 0
      %1140 = vmatpush1.bf16.msra.mxu0 0
      %1141 = vmatprep.subr.bf16.mxu0 0
      %1142 = vmatpush1.bf16.msra.mxu0 0
      %1143 = vmatprep.subr.bf16.mxu0 0
      %1144 = vmatpush1.bf16.msra.mxu0 0
      %1145 = vmatprep.subr.bf16.mxu0 0
      %1146 = vmatpush1.bf16.msra.mxu0 0
      %1147 = vmatprep.mubr.bf16.mxu0 0
      %1148 = vmatmul.mubr.bf16.gmra.mrb[0].mxu0 %v1113
      %v1149 = vpop.f32.mrb[0].mxu0
      %v1150 = vadd.f32 0.0, %v1149
      %v1151 = vpop.f32.mrb[0].mxu0
      %v1152 = vpop.f32.mrb[0].mxu0
      %v1153 = vadd.f32 0.0, %v1152
      %v1154 = vpop.f32.mrb[0].mxu0
      %1155 = vdwg.mxu0
      %v1156 = vpack.c.bf16 %v1153, %v1150
      %v1159 = vunpack.c.l.b16 %v902
      %v1160 = vunpack.c.l.b16 %v903
      %v1161 = vpack.c.b16 %v1160, %v1159
      %v1164 = vsel %vm908, %v1156, 0
      %1166 = vmatprep.subr.bf16.mxu0 0
      %1167 = vmatpush1.bf16.msra.mxu0 %v1161
      %1168 = vmatprep.subr.bf16.mxu0 0
      %1169 = vmatpush1.bf16.msra.mxu0 0
      %1170 = vmatprep.subr.bf16.mxu0 0
      %1171 = vmatpush1.bf16.msra.mxu0 0
      %1172 = vmatprep.subr.bf16.mxu0 0
      %1173 = vmatpush1.bf16.msra.mxu0 0
      %1174 = vmatprep.subr.bf16.mxu0 0
      %1175 = vmatpush1.bf16.msra.mxu0 0
      %1176 = vmatprep.subr.bf16.mxu0 0
      %1177 = vmatpush1.bf16.msra.mxu0 0
      %1178 = vmatprep.subr.bf16.mxu0 0
      %1179 = vmatpush1.bf16.msra.mxu0 0
      %1180 = vmatprep.subr.bf16.mxu0 0
      %1181 = vmatpush1.bf16.msra.mxu0 0
      %1182 = vmatprep.subr.bf16.mxu0 0
      %1183 = vmatpush1.bf16.msra.mxu0 0
      %1184 = vmatprep.subr.bf16.mxu0 0
      %1185 = vmatpush1.bf16.msra.mxu0 0
      %1186 = vmatprep.subr.bf16.mxu0 0
      %1187 = vmatpush1.bf16.msra.mxu0 0
      %1188 = vmatprep.subr.bf16.mxu0 0
      %1189 = vmatpush1.bf16.msra.mxu0 0
      %1190 = vmatprep.subr.bf16.mxu0 0
      %1191 = vmatpush1.bf16.msra.mxu0 0
      %1192 = vmatprep.subr.bf16.mxu0 0
      %1193 = vmatpush1.bf16.msra.mxu0 0
      %1194 = vmatprep.subr.bf16.mxu0 0
      %1195 = vmatpush1.bf16.msra.mxu0 0
      %1196 = vmatprep.subr.bf16.mxu0 0
      %1197 = vmatpush1.bf16.msra.mxu0 0
      %1198 = vmatprep.mubr.bf16.mxu0 0
      %1199 = vmatmul.mubr.bf16.gmra.mrb[0].mxu0 %v1164
      %v1200 = vpop.f32.mrb[0].mxu0
      %v1201 = vadd.f32 0.0, %v1200
      %v1202 = vpop.f32.mrb[0].mxu0
      %v1203 = vpop.f32.mrb[0].mxu0
      %v1204 = vadd.f32 0.0, %v1203
      %v1205 = vpop.f32.mrb[0].mxu0
      %1206 = vdwg.mxu0
      %v1209 = vunpack.c.l.b16 %v900
      %v1210 = vunpack.c.l.b16 %v901
      %v1211 = vpack.c.b16 %v1210, %v1209
      %v1214 = vsel %vm908, %v1030, 0
      %1216 = vmatprep.subr.bf16.mxu0 0
      %1217 = vmatpush1.bf16.msra.mxu0 %v1211
      %1218 = vmatprep.subr.bf16.mxu0 0
      %1219 = vmatpush1.bf16.msra.mxu0 0
      %1220 = vmatprep.subr.bf16.mxu0 0
      %1221 = vmatpush1.bf16.msra.mxu0 0
      %1222 = vmatprep.subr.bf16.mxu0 0
      %1223 = vmatpush1.bf16.msra.mxu0 0
      %1224 = vmatprep.subr.bf16.mxu0 0
      %1225 = vmatpush1.bf16.msra.mxu0 0
      %1226 = vmatprep.subr.bf16.mxu0 0
      %1227 = vmatpush1.bf16.msra.mxu0 0
      %1228 = vmatprep.subr.bf16.mxu0 0
      %1229 = vmatpush1.bf16.msra.mxu0 0
      %1230 = vmatprep.subr.bf16.mxu0 0
      %1231 = vmatpush1.bf16.msra.mxu0 0
      %1232 = vmatprep.subr.bf16.mxu0 0
      %1233 = vmatpush1.bf16.msra.mxu0 0
      %1234 = vmatprep.subr.bf16.mxu0 0
      %1235 = vmatpush1.bf16.msra.mxu0 0
      %1236 = vmatprep.subr.bf16.mxu0 0
      %1237 = vmatpush1.bf16.msra.mxu0 0
      %1238 = vmatprep.subr.bf16.mxu0 0
      %1239 = vmatpush1.bf16.msra.mxu0 0
      %1240 = vmatprep.subr.bf16.mxu0 0
      %1241 = vmatpush1.bf16.msra.mxu0 0
      %1242 = vmatprep.subr.bf16.mxu0 0
      %1243 = vmatpush1.bf16.msra.mxu0 0
      %1244 = vmatprep.subr.bf16.mxu0 0
      %1245 = vmatpush1.bf16.msra.mxu0 0
      %1246 = vmatprep.subr.bf16.mxu0 0
      %1247 = vmatpush1.bf16.msra.mxu0 0
      %1248 = vmatprep.mubr.bf16.mxu0 0
      %1249 = vmatmul.mubr.bf16.gmra.mrb[0].mxu0 %v1214
      %v1250 = vpop.f32.mrb[0].mxu0
      %v1251 = vadd.f32 %v1201, %v1250
      %v1252 = vpop.f32.mrb[0].mxu0
      %v1253 = vpop.f32.mrb[0].mxu0
      %v1254 = vadd.f32 %v1204, %v1253
      %v1255 = vpop.f32.mrb[0].mxu0
      %1256 = vdwg.mxu0
      %v1257 = vadd.f32 %v766, %v1251
      %v1258 = vadd.f32 %v767, %v1254
      %v1259 = vld [vmem:[%s8] sm:$0x1]
      %v1261 = vlaneseq
      %v1262 = vshrl.u32 %v1261, 7
      %v1263 = vsub.s32 0, %v1262
      %v1264 = vrot.slane %v1259, %v1263
      %v1266 = vadd.f32 %v1257, %v1264
      %v1267 = vadd.f32 %v1258, %v1264
      %v1268 = vld [vmem:[%s15] sm:$0x1]
      %v1269 = vld [vmem:[%s16] sm:$0x1]
      %v1270 = vsel %vm762, %v1266, 0.0
      %1271 = vadd.xlane.f32.xlu0 %v1270
      %v1272 = vpop.xlane.xlu0 %1271
      %v1273 = vsel %vm762, %v1267, 0.0
      %1274 = vadd.xlane.f32.xlu0 %v1273
      %v1275 = vpop.xlane.xlu0 %1274
      %v1276 = vmul.f32 %v1272, %v795
      %v1277 = vmul.f32 %v1275, %v795
      %v1278 = vsub.f32 %v1266, %v1276
      %v1279 = vsub.f32 %v1267, %v1277
      %v1280 = vmul.f32 %v1278, %v1278
      %v1281 = vmul.f32 %v1279, %v1279
      %v1282 = vsel %vm762, %v1280, 0.0
      %1283 = vadd.xlane.f32.xlu0 %v1282
      %v1284 = vpop.xlane.xlu0 %1283
      %v1285 = vsel %vm762, %v1281, 0.0
      %1286 = vadd.xlane.f32.xlu0 %v1285
      %v1287 = vpop.xlane.xlu0 %1286
      %v1288 = vmul.f32 %v1284, %v795
      %v1289 = vmul.f32 %v1287, %v795
      %v1290 = vadd.f32 %v1288, 1e-05
      %v1291 = vadd.f32 %v1289, 1e-05
      %v1292 = vrsqrt.pop %v1290
      %v1293 = vrsqrt.pop %v1291
      %v1294 = vmul.f32 %v1278, %v1292
      %v1295 = vmul.f32 %v1279, %v1293
      %v1297 = vlaneseq
      %v1298 = vshrl.u32 %v1297, 7
      %v1299 = vsub.s32 0, %v1298
      %v1300 = vrot.slane %v1268, %v1299
      %v1302 = vmul.f32 %v1294, %v1300
      %v1303 = vmul.f32 %v1295, %v1300
      %v1305 = vlaneseq
      %v1306 = vshrl.u32 %v1305, 7
      %v1307 = vsub.s32 0, %v1306
      %v1308 = vrot.slane %v1269, %v1307
      %v1310 = vadd.f32 %v1302, %v1308
      %v1311 = vadd.f32 %v1303, %v1308
      %v1312 = vpack.c.bf16 %v1311, %v1310
      %v1313 = vld [vmem:[%s9] sm:$0xf]
      %v1314 = vld [vmem:[%s9 + $0x4] sm:$0xf]
      %v1315 = vld [vmem:[%s9 + $0x8] sm:$0xf]
      %v1316 = vld [vmem:[%s9 + $0xc] sm:$0xf]
      %v1317 = vld [vmem:[%s10] sm:$0x1]
      %v1319 = vlaneseq
      %v1320 = vshrl.u32 %v1319, 7
      %v1321 = vsub.s32 0, %v1320
      %v1322 = vrot.slane %v1317, %v1321
      %v1328 = vunpack.c.l.b16 %v1313
      %v1329 = vunpack.c.l.b16 %v1314
      %v1330 = vunpack.c.l.b16 %v1315
      %v1331 = vunpack.c.l.b16 %v1316
      %v1332 = vpack.c.b16 %v1329, %v1328
      %v1333 = vpack.c.b16 %v1331, %v1330
      %v1337 = vsel %vm762, %v1312, 0
      %1339 = vmatprep.subr.bf16.mxu0 0
      %1340 = vmatpush1.bf16.msra.mxu0 %v1332
      %1341 = vmatprep.subr.bf16.mxu0 0
      %1342 = vmatpush1.bf16.msra.mxu0 %v1333
      %1343 = vmatprep.subr.bf16.mxu0 0
      %1344 = vmatpush1.bf16.msra.mxu0 0
      %1345 = vmatprep.subr.bf16.mxu0 0
      %1346 = vmatpush1.bf16.msra.mxu0 0
      %1347 = vmatprep.subr.bf16.mxu0 0
      %1348 = vmatpush1.bf16.msra.mxu0 0
      %1349 = vmatprep.subr.bf16.mxu0 0
      %1350 = vmatpush1.bf16.msra.mxu0 0
      %1351 = vmatprep.subr.bf16.mxu0 0
      %1352 = vmatpush1.bf16.msra.mxu0 0
      %1353 = vmatprep.subr.bf16.mxu0 0
      %1354 = vmatpush1.bf16.msra.mxu0 0
      %1355 = vmatprep.subr.bf16.mxu0 0
      %1356 = vmatpush1.bf16.msra.mxu0 0
      %1357 = vmatprep.subr.bf16.mxu0 0
      %1358 = vmatpush1.bf16.msra.mxu0 0
      %1359 = vmatprep.subr.bf16.mxu0 0
      %1360 = vmatpush1.bf16.msra.mxu0 0
      %1361 = vmatprep.subr.bf16.mxu0 0
      %1362 = vmatpush1.bf16.msra.mxu0 0
      %1363 = vmatprep.subr.bf16.mxu0 0
      %1364 = vmatpush1.bf16.msra.mxu0 0
      %1365 = vmatprep.subr.bf16.mxu0 0
      %1366 = vmatpush1.bf16.msra.mxu0 0
      %1367 = vmatprep.subr.bf16.mxu0 0
      %1368 = vmatpush1.bf16.msra.mxu0 0
      %1369 = vmatprep.subr.bf16.mxu0 0
      %1370 = vmatpush1.bf16.msra.mxu0 0
      %1371 = vmatprep.mubr.bf16.mxu0 0
      %1372 = vmatmul.mubr.bf16.gmra.mrb[0].mxu0 %v1337
      %v1373 = vpop.f32.mrb[0].mxu0
      %v1374 = vadd.f32 %v1322, %v1373
      %v1375 = vpop.f32.mrb[0].mxu0
      %v1376 = vpop.f32.mrb[0].mxu0
      %v1377 = vadd.f32 %v1322, %v1376
      %v1378 = vpop.f32.mrb[0].mxu0
      %1379 = vdwg.mxu0
      %v1380 = vmul.f32 %v1374, %v1374
      %v1381 = vmul.f32 %v1377, %v1377
      %v1382 = vmul.f32 %v1374, %v1380
      %v1383 = vmul.f32 %v1377, %v1381
      %v1384 = vmul.f32 %v1382, 0.044715
      %v1385 = vmul.f32 %v1383, 0.044715
      %v1386 = vadd.f32 %v1374, %v1384
      %v1387 = vadd.f32 %v1377, %v1385
      %v1388 = vmul.f32 %v1386, 0.7978846
      %v1389 = vmul.f32 %v1387, 0.7978846
      %v1390 = vtanh.pop %v1388
      %v1391 = vtanh.pop %v1389
      %v1392 = vadd.f32 %v1390, 1.0
      %v1393 = vadd.f32 %v1391, 1.0
      %v1394 = vmul.f32 %v1392, 0.5
      %v1395 = vmul.f32 %v1393, 0.5
      %v1396 = vmul.f32 %v1374, %v1394
      %v1397 = vmul.f32 %v1377, %v1395
      %v1398 = vpack.c.bf16 %v1397, %v1396
      %v1399 = vld [vmem:[%s11] sm:$0xf]
      %v1400 = vld [vmem:[%s11 + $0x4] sm:$0xf]
      %v1401 = vld [vmem:[%s11 + $0x8] sm:$0xf]
      %v1402 = vld [vmem:[%s11 + $0xc] sm:$0xf]
      %v1403 = vld [vmem:[%s11 + $0x10] sm:$0xf]
      %v1404 = vld [vmem:[%s11 + $0x14] sm:$0xf]
      %v1405 = vld [vmem:[%s11 + $0x18] sm:$0xf]
      %v1406 = vld [vmem:[%s11 + $0x1c] sm:$0xf]
      %v1407 = vld [vmem:[%s11 + $0x20] sm:$0xf]
      %v1408 = vld [vmem:[%s11 + $0x24] sm:$0xf]
      %v1409 = vld [vmem:[%s11 + $0x28] sm:$0xf]
      %v1410 = vld [vmem:[%s11 + $0x2c] sm:$0xf]
      %v1411 = vld [vmem:[%s11 + $0x30] sm:$0xf]
      %v1412 = vld [vmem:[%s11 + $0x34] sm:$0xf]
      %v1413 = vld [vmem:[%s11 + $0x38] sm:$0xf]
      %v1414 = vld [vmem:[%s11 + $0x3c] sm:$0xf]
      %v1415 = vld [vmem:[%s12] sm:$0x1]
      %v1417 = vlaneseq
      %v1418 = vshrl.u32 %v1417, 7
      %v1419 = vsub.s32 0, %v1418
      %v1420 = vrot.slane %v1415, %v1419
      %v1438 = vunpack.c.l.b16 %v1399
      %v1439 = vunpack.c.l.b16 %v1400
      %v1440 = vunpack.c.l.b16 %v1401
      %v1441 = vunpack.c.l.b16 %v1402
      %v1442 = vunpack.c.l.b16 %v1403
      %v1443 = vunpack.c.l.b16 %v1404
      %v1444 = vunpack.c.l.b16 %v1405
      %v1445 = vunpack.c.l.b16 %v1406
      %v1446 = vunpack.c.l.b16 %v1407
      %v1447 = vunpack.c.l.b16 %v1408
      %v1448 = vunpack.c.l.b16 %v1409
      %v1449 = vunpack.c.l.b16 %v1410
      %v1450 = vunpack.c.l.b16 %v1411
      %v1451 = vunpack.c.l.b16 %v1412
      %v1452 = vunpack.c.l.b16 %v1413
      %v1453 = vunpack.c.l.b16 %v1414
      %v1454 = vpack.c.b16 %v1439, %v1438
      %v1455 = vpack.c.b16 %v1441, %v1440
      %v1456 = vpack.c.b16 %v1443, %v1442
      %v1457 = vpack.c.b16 %v1445, %v1444
      %v1458 = vpack.c.b16 %v1447, %v1446
      %v1459 = vpack.c.b16 %v1449, %v1448
      %v1460 = vpack.c.b16 %v1451, %v1450
      %v1461 = vpack.c.b16 %v1453, %v1452
      %1470 = vmatprep.subr.bf16.mxu0 0
      %1471 = vmatpush1.bf16.msra.mxu0 %v1454
      %1472 = vmatprep.subr.bf16.mxu0 0
      %1473 = vmatpush1.bf16.msra.mxu0 %v1455
      %1474 = vmatprep.subr.bf16.mxu0 0
      %1475 = vmatpush1.bf16.msra.mxu0 %v1456
      %1476 = vmatprep.subr.bf16.mxu0 0
      %1477 = vmatpush1.bf16.msra.mxu0 %v1457
      %1478 = vmatprep.subr.bf16.mxu0 0
      %1479 = vmatpush1.bf16.msra.mxu0 %v1458
      %1480 = vmatprep.subr.bf16.mxu0 0
      %1481 = vmatpush1.bf16.msra.mxu0 %v1459
      %1482 = vmatprep.subr.bf16.mxu0 0
      %1483 = vmatpush1.bf16.msra.mxu0 %v1460
      %1484 = vmatprep.subr.bf16.mxu0 0
      %1485 = vmatpush1.bf16.msra.mxu0 %v1461
      %1486 = vmatprep.subr.bf16.mxu0 0
      %1487 = vmatpush1.bf16.msra.mxu0 0
      %1488 = vmatprep.subr.bf16.mxu0 0
      %1489 = vmatpush1.bf16.msra.mxu0 0
      %1490 = vmatprep.subr.bf16.mxu0 0
      %1491 = vmatpush1.bf16.msra.mxu0 0
      %1492 = vmatprep.subr.bf16.mxu0 0
      %1493 = vmatpush1.bf16.msra.mxu0 0
      %1494 = vmatprep.subr.bf16.mxu0 0
      %1495 = vmatpush1.bf16.msra.mxu0 0
      %1496 = vmatprep.subr.bf16.mxu0 0
      %1497 = vmatpush1.bf16.msra.mxu0 0
      %1498 = vmatprep.subr.bf16.mxu0 0
      %1499 = vmatpush1.bf16.msra.mxu0 0
      %1500 = vmatprep.subr.bf16.mxu0 0
      %1501 = vmatpush1.bf16.msra.mxu0 0
      %1502 = vmatprep.mubr.bf16.mxu0 0
      %1503 = vmatmul.mubr.bf16.gmra.mrb[0].mxu0 %v1398
      %v1504 = vpop.f32.mrb[0].mxu0
      %v1505 = vadd.f32 %v1420, %v1504
      %v1506 = vpop.f32.mrb[0].mxu0
      %v1507 = vpop.f32.mrb[0].mxu0
      %v1508 = vadd.f32 %v1420, %v1507
      %v1509 = vpop.f32.mrb[0].mxu0
      %1510 = vdwg.mxu0
      %v1511 = vadd.f32 %v1266, %v1505
      %v1512 = vadd.f32 %v1267, %v1508
      %s1513 = scalar_lea.vmem %s13, 1
      %v1514 = vld [vmem:[%s1513] sm:$0x1]
      %s1515 = scalar_lea.vmem %s14, 1
      %v1516 = vld [vmem:[%s1515] sm:$0x1]
      %v1517 = vsel %vm762, %v1511, 0.0
      %1518 = vadd.xlane.f32.xlu0 %v1517
      %v1519 = vpop.xlane.xlu0 %1518
      %v1520 = vsel %vm762, %v1512, 0.0
      %1521 = vadd.xlane.f32.xlu0 %v1520
      %v1522 = vpop.xlane.xlu0 %1521
      %v1523 = vmul.f32 %v1519, %v795
      %v1524 = vmul.f32 %v1522, %v795
      %v1525 = vsub.f32 %v1511, %v1523
      %v1526 = vsub.f32 %v1512, %v1524
      %v1527 = vmul.f32 %v1525, %v1525
      %v1528 = vmul.f32 %v1526, %v1526
      %v1529 = vsel %vm762, %v1527, 0.0
      %1530 = vadd.xlane.f32.xlu0 %v1529
      %v1531 = vpop.xlane.xlu0 %1530
      %v1532 = vsel %vm762, %v1528, 0.0
      %1533 = vadd.xlane.f32.xlu0 %v1532
      %v1534 = vpop.xlane.xlu0 %1533
      %v1535 = vmul.f32 %v1531, %v795
      %v1536 = vmul.f32 %v1534, %v795
      %v1537 = vadd.f32 %v1535, 1e-05
      %v1538 = vadd.f32 %v1536, 1e-05
      %v1539 = vrsqrt.pop %v1537
      %v1540 = vrsqrt.pop %v1538
      %v1541 = vmul.f32 %v1525, %v1539
      %v1542 = vmul.f32 %v1526, %v1540
      %v1544 = vlaneseq
      %v1545 = vshrl.u32 %v1544, 7
      %v1546 = vsub.s32 0, %v1545
      %v1547 = vrot.slane %v1514, %v1546
      %v1549 = vmul.f32 %v1541, %v1547
      %v1550 = vmul.f32 %v1542, %v1547
      %v1552 = vlaneseq
      %v1553 = vshrl.u32 %v1552, 7
      %v1554 = vsub.s32 0, %v1553
      %v1555 = vrot.slane %v1516, %v1554
      %v1557 = vadd.f32 %v1549, %v1555
      %v1558 = vadd.f32 %v1550, %v1555
      %v1559 = vpack.c.bf16 %v1558, %v1557
      %s1560 = scalar_lea.vmem %s5, 16
      %v1561 = vld [vmem:[%s1560] sm:$0xf]
      %v1562 = vld [vmem:[%s1560 + $0x4] sm:$0xf]
      %v1563 = vld [vmem:[%s1560 + $0x8] sm:$0xf]
      %v1564 = vld [vmem:[%s1560 + $0xc] sm:$0xf]
      %s1565 = scalar_lea.vmem %s6, 1
      %v1566 = vld [vmem:[%s1565] sm:$0x1]
      %v1568 = vlaneseq
      %v1569 = vshrl.u32 %v1568, 7
      %v1570 = vsub.s32 0, %v1569
      %v1571 = vrot.slane %v1566, %v1570
      %v1577 = vunpack.c.l.b16 %v1561
      %v1578 = vunpack.c.l.b16 %v1562
      %v1579 = vunpack.c.l.b16 %v1563
      %v1580 = vunpack.c.l.b16 %v1564
      %v1581 = vpack.c.b16 %v1578, %v1577
      %v1582 = vpack.c.b16 %v1580, %v1579
      %v1586 = vsel %vm762, %v1559, 0
      %1588 = vmatprep.subr.bf16.mxu0 0
      %1589 = vmatpush1.bf16.msra.mxu0 %v1581
      %1590 = vmatprep.subr.bf16.mxu0 0
      %1591 = vmatpush1.bf16.msra.mxu0 %v1582
      %1592 = vmatprep.subr.bf16.mxu0 0
      %1593 = vmatpush1.bf16.msra.mxu0 0
      %1594 = vmatprep.subr.bf16.mxu0 0
      %1595 = vmatpush1.bf16.msra.mxu0 0
      %1596 = vmatprep.subr.bf16.mxu0 0
      %1597 = vmatpush1.bf16.msra.mxu0 0
      %1598 = vmatprep.subr.bf16.mxu0 0
      %1599 = vmatpush1.bf16.msra.mxu0 0
      %1600 = vmatprep.subr.bf16.mxu0 0
      %1601 = vmatpush1.bf16.msra.mxu0 0
      %1602 = vmatprep.subr.bf16.mxu0 0
      %1603 = vmatpush1.bf16.msra.mxu0 0
      %1604 = vmatprep.subr.bf16.mxu0 0
      %1605 = vmatpush1.bf16.msra.mxu0 0
      %1606 = vmatprep.subr.bf16.mxu0 0
      %1607 = vmatpush1.bf16.msra.mxu0 0
      %1608 = vmatprep.subr.bf16.mxu0 0
      %1609 = vmatpush1.bf16.msra.mxu0 0
      %1610 = vmatprep.subr.bf16.mxu0 0
      %1611 = vmatpush1.bf16.msra.mxu0 0
      %1612 = vmatprep.subr.bf16.mxu0 0
      %1613 = vmatpush1.bf16.msra.mxu0 0
      %1614 = vmatprep.subr.bf16.mxu0 0
      %1615 = vmatpush1.bf16.msra.mxu0 0
      %1616 = vmatprep.subr.bf16.mxu0 0
      %1617 = vmatpush1.bf16.msra.mxu0 0
      %1618 = vmatprep.subr.bf16.mxu0 0
      %1619 = vmatpush1.bf16.msra.mxu0 0
      %1620 = vmatprep.mubr.bf16.mxu0 0
      %1621 = vmatmul.mubr.bf16.gmra.mrb[0].mxu0 %v1586
      %v1622 = vpop.f32.mrb[0].mxu0
      %v1623 = vadd.f32 %v1571, %v1622
      %v1624 = vpop.f32.mrb[0].mxu0
      %v1625 = vpop.f32.mrb[0].mxu0
      %v1626 = vadd.f32 %v1571, %v1625
      %v1627 = vpop.f32.mrb[0].mxu0
      %1628 = vdwg.mxu0
      %s1629 = scalar_lea.vmem %s7, 16
      %v1630 = vld [vmem:[%s1629] sm:$0xf]
      %v1631 = vld [vmem:[%s1629 + $0x4] sm:$0xf]
      %v1632 = vld [vmem:[%s1629 + $0x8] sm:$0xf]
      %v1633 = vld [vmem:[%s1629 + $0xc] sm:$0xf]
      %v1634 = vpack.c.bf16 %v1626, %v1623
      %1636 = vrot.lane.b32.xlu0 %v1634, 96
      %v1637 = vpop.permute.xlu0 %1636
      %v1639 = vsel %vm908, %v1634, 0
      %v1642 = vsel %vm908, %v1637, 0
      %1644 = vmatprep.subr.bf16.mxu0 0
      %1645 = vmatpush1.bf16.xpose.msra.mxu0 %v1642
      %1646 = vmatprep.subr.bf16.mxu0 0
      %1647 = vmatpush1.bf16.xpose.msra.mxu0 0
      %1648 = vmatprep.subr.bf16.mxu0 0
      %1649 = vmatpush1.bf16.xpose.msra.mxu0 0
      %1650 = vmatprep.subr.bf16.mxu0 0
      %1651 = vmatpush1.bf16.xpose.msra.mxu0 0
      %1652 = vmatprep.subr.bf16.mxu0 0
      %1653 = vmatpush1.bf16.xpose.msra.mxu0 0
      %1654 = vmatprep.subr.bf16.mxu0 0
      %1655 = vmatpush1.bf16.xpose.msra.mxu0 0
      %1656 = vmatprep.subr.bf16.mxu0 0
      %1657 = vmatpush1.bf16.xpose.msra.mxu0 0
      %1658 = vmatprep.subr.bf16.mxu0 0
      %1659 = vmatpush1.bf16.xpose.msra.mxu0 0
      %1660 = vmatprep.subr.bf16.mxu0 0
      %1661 = vmatpush1.bf16.xpose.msra.mxu0 0
      %1662 = vmatprep.subr.bf16.mxu0 0
      %1663 = vmatpush1.bf16.xpose.msra.mxu0 0
      %1664 = vmatprep.subr.bf16.mxu0 0
      %1665 = vmatpush1.bf16.xpose.msra.mxu0 0
      %1666 = vmatprep.subr.bf16.mxu0 0
      %1667 = vmatpush1.bf16.xpose.msra.mxu0 0
      %1668 = vmatprep.subr.bf16.mxu0 0
      %1669 = vmatpush1.bf16.xpose.msra.mxu0 0
      %1670 = vmatprep.subr.bf16.mxu0 0
      %1671 = vmatpush1.bf16.xpose.msra.mxu0 0
      %1672 = vmatprep.subr.bf16.mxu0 0
      %1673 = vmatpush1.bf16.xpose.msra.mxu0 0
      %1674 = vmatprep.subr.bf16.mxu0 0
      %1675 = vmatpush1.bf16.xpose.msra.mxu0 0
      %1676 = vmatprep.mubr.bf16.mxu0 0
      %1677 = vmatmul.mubr.bf16.gmra.mrb[0].mxu0 %v1639
      %v1678 = vpop.f32.mrb[0].mxu0
      %v1679 = vadd.f32 0.0, %v1678
      %v1680 = vpop.f32.mrb[0].mxu0
      %v1681 = vpop.f32.mrb[0].mxu0
      %v1682 = vadd.f32 0.0, %v1681
      %v1683 = vpop.f32.mrb[0].mxu0
      %1684 = vdwg.mxu0
      %v1685 = vmul.f32 %v1679, 0.25
      %v1686 = vmul.f32 %v1682, 0.25
      %v1687 = vadd.f32 %v1685, %v785
      %v1688 = vadd.f32 %v1686, %v786
      %v1689 = vsel %vm908, %v1687, -inf
      %1690 = vmax.xlane.f32.xlu0 %v1689
      %v1691 = vpop.xlane.xlu0 %1690
      %v1692 = vsel %vm908, %v1688, -inf
      %1693 = vmax.xlane.f32.xlu0 %v1692
      %v1694 = vpop.xlane.xlu0 %1693
      %v1695 = vsub.f32 %v1687, %v1691
      %v1696 = vsub.f32 %v1688, %v1694
      %v1697 = vmul.f32 %v1695, 1.442695
      %v1698 = vpow.pop %v1697
      %v1699 = vmul.f32 %v1696, 1.442695
      %v1700 = vpow.pop %v1699
      %v1701 = vsel %vm908, %v1698, 0.0
      %1702 = vadd.xlane.f32.xlu0 %v1701
      %v1703 = vpop.xlane.xlu0 %1702
      %v1704 = vsel %vm908, %v1700, 0.0
      %1705 = vadd.xlane.f32.xlu0 %v1704
      %v1706 = vpop.xlane.xlu0 %1705
      %v1707 = vrcp.pop %v1703
      %v1708 = vrcp.pop %v1706
      %v1709 = vmul.f32 %v1698, %v1707
      %v1710 = vmul.f32 %v1700, %v1708
      %v1711 = vpack.c.bf16 %v1710, %v1709
      %1712 = vrot.lane.b32.xlu0 %v1634, 64
      %v1713 = vpop.permute.xlu0 %1712
      %v1716 = vsel %vm908, %v1711, 0
      %1718 = vmatprep.subr.bf16.mxu0 0
      %1719 = vmatpush1.bf16.msra.mxu0 %v1713
      %1720 = vmatprep.subr.bf16.mxu0 0
      %1721 = vmatpush1.bf16.msra.mxu0 0
      %1722 = vmatprep.subr.bf16.mxu0 0
      %1723 = vmatpush1.bf16.msra.mxu0 0
      %1724 = vmatprep.subr.bf16.mxu0 0
      %1725 = vmatpush1.bf16.msra.mxu0 0
      %1726 = vmatprep.subr.bf16.mxu0 0
      %1727 = vmatpush1.bf16.msra.mxu0 0
      %1728 = vmatprep.subr.bf16.mxu0 0
      %1729 = vmatpush1.bf16.msra.mxu0 0
      %1730 = vmatprep.subr.bf16.mxu0 0
      %1731 = vmatpush1.bf16.msra.mxu0 0
      %1732 = vmatprep.subr.bf16.mxu0 0
      %1733 = vmatpush1.bf16.msra.mxu0 0
      %1734 = vmatprep.subr.bf16.mxu0 0
      %1735 = vmatpush1.bf16.msra.mxu0 0
      %1736 = vmatprep.subr.bf16.mxu0 0
      %1737 = vmatpush1.bf16.msra.mxu0 0
      %1738 = vmatprep.subr.bf16.mxu0 0
      %1739 = vmatpush1.bf16.msra.mxu0 0
      %1740 = vmatprep.subr.bf16.mxu0 0
      %1741 = vmatpush1.bf16.msra.mxu0 0
      %1742 = vmatprep.subr.bf16.mxu0 0
      %1743 = vmatpush1.bf16.msra.mxu0 0
      %1744 = vmatprep.subr.bf16.mxu0 0
      %1745 = vmatpush1.bf16.msra.mxu0 0
      %1746 = vmatprep.subr.bf16.mxu0 0
      %1747 = vmatpush1.bf16.msra.mxu0 0
      %1748 = vmatprep.subr.bf16.mxu0 0
      %1749 = vmatpush1.bf16.msra.mxu0 0
      %1750 = vmatprep.mubr.bf16.mxu0 0
      %1751 = vmatmul.mubr.bf16.gmra.mrb[0].mxu0 %v1716
      %v1752 = vpop.f32.mrb[0].mxu0
      %v1753 = vadd.f32 0.0, %v1752
      %v1754 = vpop.f32.mrb[0].mxu0
      %v1755 = vpop.f32.mrb[0].mxu0
      %v1756 = vadd.f32 0.0, %v1755
      %v1757 = vpop.f32.mrb[0].mxu0
      %1758 = vdwg.mxu0
      %v1759 = vpack.c.bf16 %v1756, %v1753
      %1760 = vrot.lane.b32.xlu0 %v1634, 112
      %v1761 = vpop.permute.xlu0 %1760
      %1762 = vrot.lane.b32.xlu0 %v1634, 80
      %v1763 = vpop.permute.xlu0 %1762
      %v1765 = vsel %vm908, %v1761, 0
      %v1768 = vsel %vm908, %v1763, 0
      %1770 = vmatprep.subr.bf16.mxu0 0
      %1771 = vmatpush1.bf16.xpose.msra.mxu0 %v1768
      %1772 = vmatprep.subr.bf16.mxu0 0
      %1773 = vmatpush1.bf16.xpose.msra.mxu0 0
      %1774 = vmatprep.subr.bf16.mxu0 0
      %1775 = vmatpush1.bf16.xpose.msra.mxu0 0
      %1776 = vmatprep.subr.bf16.mxu0 0
      %1777 = vmatpush1.bf16.xpose.msra.mxu0 0
      %1778 = vmatprep.subr.bf16.mxu0 0
      %1779 = vmatpush1.bf16.xpose.msra.mxu0 0
      %1780 = vmatprep.subr.bf16.mxu0 0
      %1781 = vmatpush1.bf16.xpose.msra.mxu0 0
      %1782 = vmatprep.subr.bf16.mxu0 0
      %1783 = vmatpush1.bf16.xpose.msra.mxu0 0
      %1784 = vmatprep.subr.bf16.mxu0 0
      %1785 = vmatpush1.bf16.xpose.msra.mxu0 0
      %1786 = vmatprep.subr.bf16.mxu0 0
      %1787 = vmatpush1.bf16.xpose.msra.mxu0 0
      %1788 = vmatprep.subr.bf16.mxu0 0
      %1789 = vmatpush1.bf16.xpose.msra.mxu0 0
      %1790 = vmatprep.subr.bf16.mxu0 0
      %1791 = vmatpush1.bf16.xpose.msra.mxu0 0
      %1792 = vmatprep.subr.bf16.mxu0 0
      %1793 = vmatpush1.bf16.xpose.msra.mxu0 0
      %1794 = vmatprep.subr.bf16.mxu0 0
      %1795 = vmatpush1.bf16.xpose.msra.mxu0 0
      %1796 = vmatprep.subr.bf16.mxu0 0
      %1797 = vmatpush1.bf16.xpose.msra.mxu0 0
      %1798 = vmatprep.subr.bf16.mxu0 0
      %1799 = vmatpush1.bf16.xpose.msra.mxu0 0
      %1800 = vmatprep.subr.bf16.mxu0 0
      %1801 = vmatpush1.bf16.xpose.msra.mxu0 0
      %1802 = vmatprep.mubr.bf16.mxu0 0
      %1803 = vmatmul.mubr.bf16.gmra.mrb[0].mxu0 %v1765
      %v1804 = vpop.f32.mrb[0].mxu0
      %v1805 = vadd.f32 0.0, %v1804
      %v1806 = vpop.f32.mrb[0].mxu0
      %v1807 = vpop.f32.mrb[0].mxu0
      %v1808 = vadd.f32 0.0, %v1807
      %v1809 = vpop.f32.mrb[0].mxu0
      %1810 = vdwg.mxu0
      %v1811 = vmul.f32 %v1805, 0.25
      %v1812 = vmul.f32 %v1808, 0.25
      %v1813 = vadd.f32 %v1811, %v785
      %v1814 = vadd.f32 %v1812, %v786
      %v1815 = vsel %vm908, %v1813, -inf
      %1816 = vmax.xlane.f32.xlu0 %v1815
      %v1817 = vpop.xlane.xlu0 %1816
      %v1818 = vsel %vm908, %v1814, -inf
      %1819 = vmax.xlane.f32.xlu0 %v1818
      %v1820 = vpop.xlane.xlu0 %1819
      %v1821 = vsub.f32 %v1813, %v1817
      %v1822 = vsub.f32 %v1814, %v1820
      %v1823 = vmul.f32 %v1821, 1.442695
      %v1824 = vpow.pop %v1823
      %v1825 = vmul.f32 %v1822, 1.442695
      %v1826 = vpow.pop %v1825
      %v1827 = vsel %vm908, %v1824, 0.0
      %1828 = vadd.xlane.f32.xlu0 %v1827
      %v1829 = vpop.xlane.xlu0 %1828
      %v1830 = vsel %vm908, %v1826, 0.0
      %1831 = vadd.xlane.f32.xlu0 %v1830
      %v1832 = vpop.xlane.xlu0 %1831
      %v1833 = vrcp.pop %v1829
      %v1834 = vrcp.pop %v1832
      %v1835 = vmul.f32 %v1824, %v1833
      %v1836 = vmul.f32 %v1826, %v1834
      %v1837 = vpack.c.bf16 %v1836, %v1835
      %1838 = vrot.lane.b32.xlu0 %v1634, 48
      %v1839 = vpop.permute.xlu0 %1838
      %v1842 = vsel %vm908, %v1837, 0
      %1844 = vmatprep.subr.bf16.mxu0 0
      %1845 = vmatpush1.bf16.msra.mxu0 %v1839
      %1846 = vmatprep.subr.bf16.mxu0 0
      %1847 = vmatpush1.bf16.msra.mxu0 0
      %1848 = vmatprep.subr.bf16.mxu0 0
      %1849 = vmatpush1.bf16.msra.mxu0 0
      %1850 = vmatprep.subr.bf16.mxu0 0
      %1851 = vmatpush1.bf16.msra.mxu0 0
      %1852 = vmatprep.subr.bf16.mxu0 0
      %1853 = vmatpush1.bf16.msra.mxu0 0
      %1854 = vmatprep.subr.bf16.mxu0 0
      %1855 = vmatpush1.bf16.msra.mxu0 0
      %1856 = vmatprep.subr.bf16.mxu0 0
      %1857 = vmatpush1.bf16.msra.mxu0 0
      %1858 = vmatprep.subr.bf16.mxu0 0
      %1859 = vmatpush1.bf16.msra.mxu0 0
      %1860 = vmatprep.subr.bf16.mxu0 0
      %1861 = vmatpush1.bf16.msra.mxu0 0
      %1862 = vmatprep.subr.bf16.mxu0 0
      %1863 = vmatpush1.bf16.msra.mxu0 0
      %1864 = vmatprep.subr.bf16.mxu0 0
      %1865 = vmatpush1.bf16.msra.mxu0 0
      %1866 = vmatprep.subr.bf16.mxu0 0
      %1867 = vmatpush1.bf16.msra.mxu0 0
      %1868 = vmatprep.subr.bf16.mxu0 0
      %1869 = vmatpush1.bf16.msra.mxu0 0
      %1870 = vmatprep.subr.bf16.mxu0 0
      %1871 = vmatpush1.bf16.msra.mxu0 0
      %1872 = vmatprep.subr.bf16.mxu0 0
      %1873 = vmatpush1.bf16.msra.mxu0 0
      %1874 = vmatprep.subr.bf16.mxu0 0
      %1875 = vmatpush1.bf16.msra.mxu0 0
      %1876 = vmatprep.mubr.bf16.mxu0 0
      %1877 = vmatmul.mubr.bf16.gmra.mrb[0].mxu0 %v1842
      %v1878 = vpop.f32.mrb[0].mxu0
      %v1879 = vadd.f32 0.0, %v1878
      %v1880 = vpop.f32.mrb[0].mxu0
      %v1881 = vpop.f32.mrb[0].mxu0
      %v1882 = vadd.f32 0.0, %v1881
      %v1883 = vpop.f32.mrb[0].mxu0
      %1884 = vdwg.mxu0
      %v1885 = vpack.c.bf16 %v1882, %v1879
      %v1888 = vunpack.c.l.b16 %v1632
      %v1889 = vunpack.c.l.b16 %v1633
      %v1890 = vpack.c.b16 %v1889, %v1888
      %v1893 = vsel %vm908, %v1885, 0
      %1895 = vmatprep.subr.bf16.mxu0 0
      %1896 = vmatpush1.bf16.msra.mxu0 %v1890
      %1897 = vmatprep.subr.bf16.mxu0 0
      %1898 = vmatpush1.bf16.msra.mxu0 0
      %1899 = vmatprep.subr.bf16.mxu0 0
      %1900 = vmatpush1.bf16.msra.mxu0 0
      %1901 = vmatprep.subr.bf16.mxu0 0
      %1902 = vmatpush1.bf16.msra.mxu0 0
      %1903 = vmatprep.subr.bf16.mxu0 0
      %1904 = vmatpush1.bf16.msra.mxu0 0
      %1905 = vmatprep.subr.bf16.mxu0 0
      %1906 = vmatpush1.bf16.msra.mxu0 0
      %1907 = vmatprep.subr.bf16.mxu0 0
      %1908 = vmatpush1.bf16.msra.mxu0 0
      %1909 = vmatprep.subr.bf16.mxu0 0
      %1910 = vmatpush1.bf16.msra.mxu0 0
      %1911 = vmatprep.subr.bf16.mxu0 0
      %1912 = vmatpush1.bf16.msra.mxu0 0
      %1913 = vmatprep.subr.bf16.mxu0 0
      %1914 = vmatpush1.bf16.msra.mxu0 0
      %1915 = vmatprep.subr.bf16.mxu0 0
      %1916 = vmatpush1.bf16.msra.mxu0 0
      %1917 = vmatprep.subr.bf16.mxu0 0
      %1918 = vmatpush1.bf16.msra.mxu0 0
      %1919 = vmatprep.subr.bf16.mxu0 0
      %1920 = vmatpush1.bf16.msra.mxu0 0
      %1921 = vmatprep.subr.bf16.mxu0 0
      %1922 = vmatpush1.bf16.msra.mxu0 0
      %1923 = vmatprep.subr.bf16.mxu0 0
      %1924 = vmatpush1.bf16.msra.mxu0 0
      %1925 = vmatprep.subr.bf16.mxu0 0
      %1926 = vmatpush1.bf16.msra.mxu0 0
      %1927 = vmatprep.mubr.bf16.mxu0 0
      %1928 = vmatmul.mubr.bf16.gmra.mrb[0].mxu0 %v1893
      %v1929 = vpop.f32.mrb[0].mxu0
      %v1930 = vadd.f32 0.0, %v1929
      %v1931 = vpop.f32.mrb[0].mxu0
      %v1932 = vpop.f32.mrb[0].mxu0
      %v1933 = vadd.f32 0.0, %v1932
      %v1934 = vpop.f32.mrb[0].mxu0
      %1935 = vdwg.mxu0
      %v1938 = vunpack.c.l.b16 %v1630
      %v1939 = vunpack.c.l.b16 %v1631
      %v1940 = vpack.c.b16 %v1939, %v1938
      %v1943 = vsel %vm908, %v1759, 0
      %1945 = vmatprep.subr.bf16.mxu0 0
      %1946 = vmatpush1.bf16.msra.mxu0 %v1940
      %1947 = vmatprep.subr.bf16.mxu0 0
      %1948 = vmatpush1.bf16.msra.mxu0 0
      %1949 = vmatprep.subr.bf16.mxu0 0
      %1950 = vmatpush1.bf16.msra.mxu0 0
      %1951 = vmatprep.subr.bf16.mxu0 0
      %1952 = vmatpush1.bf16.msra.mxu0 0
      %1953 = vmatprep.subr.bf16.mxu0 0
      %1954 = vmatpush1.bf16.msra.mxu0 0
      %1955 = vmatprep.subr.bf16.mxu0 0
      %1956 = vmatpush1.bf16.msra.mxu0 0
      %1957 = vmatprep.subr.bf16.mxu0 0
      %1958 = vmatpush1.bf16.msra.mxu0 0
      %1959 = vmatprep.subr.bf16.mxu0 0
      %1960 = vmatpush1.bf16.msra.mxu0 0
      %1961 = vmatprep.subr.bf16.mxu0 0
      %1962 = vmatpush1.bf16.msra.mxu0 0
      %1963 = vmatprep.subr.bf16.mxu0 0
      %1964 = vmatpush1.bf16.msra.mxu0 0
      %1965 = vmatprep.subr.bf16.mxu0 0
      %1966 = vmatpush1.bf16.msra.mxu0 0
      %1967 = vmatprep.subr.bf16.mxu0 0
      %1968 = vmatpush1.bf16.msra.mxu0 0
      %1969 = vmatprep.subr.bf16.mxu0 0
      %1970 = vmatpush1.bf16.msra.mxu0 0
      %1971 = vmatprep.subr.bf16.mxu0 0
      %1972 = vmatpush1.bf16.msra.mxu0 0
      %1973 = vmatprep.subr.bf16.mxu0 0
      %1974 = vmatpush1.bf16.msra.mxu0 0
      %1975 = vmatprep.subr.bf16.mxu0 0
      %1976 = vmatpush1.bf16.msra.mxu0 0
      %1977 = vmatprep.mubr.bf16.mxu0 0
      %1978 = vmatmul.mubr.bf16.gmra.mrb[0].mxu0 %v1943
      %v1979 = vpop.f32.mrb[0].mxu0
      %v1980 = vadd.f32 %v1930, %v1979
      %v1981 = vpop.f32.mrb[0].mxu0
      %v1982 = vpop.f32.mrb[0].mxu0
      %v1983 = vadd.f32 %v1933, %v1982
      %v1984 = vpop.f32.mrb[0].mxu0
      %1985 = vdwg.mxu0
      %v1986 = vadd.f32 %v1511, %v1980
      %v1987 = vadd.f32 %v1512, %v1983
      %s1988 = scalar_lea.vmem %s8, 1
      %v1989 = vld [vmem:[%s1988] sm:$0x1]
      %v1991 = vlaneseq
      %v1992 = vshrl.u32 %v1991, 7
      %v1993 = vsub.s32 0, %v1992
      %v1994 = vrot.slane %v1989, %v1993
      %v1996 = vadd.f32 %v1986, %v1994
      %v1997 = vadd.f32 %v1987, %v1994
      %s1998 = scalar_lea.vmem %s15, 1
      %v1999 = vld [vmem:[%s1998] sm:$0x1]
      %s2000 = scalar_lea.vmem %s16, 1
      %v2001 = vld [vmem:[%s2000] sm:$0x1]
      %v2002 = vsel %vm762, %v1996, 0.0
      %2003 = vadd.xlane.f32.xlu0 %v2002
      %v2004 = vpop.xlane.xlu0 %2003
      %v2005 = vsel %vm762, %v1997, 0.0
      %2006 = vadd.xlane.f32.xlu0 %v2005
      %v2007 = vpop.xlane.xlu0 %2006
      %v2008 = vmul.f32 %v2004, %v795
      %v2009 = vmul.f32 %v2007, %v795
      %v2010 = vsub.f32 %v1996, %v2008
      %v2011 = vsub.f32 %v1997, %v2009
      %v2012 = vmul.f32 %v2010, %v2010
      %v2013 = vmul.f32 %v2011, %v2011
      %v2014 = vsel %vm762, %v2012, 0.0
      %2015 = vadd.xlane.f32.xlu0 %v2014
      %v2016 = vpop.xlane.xlu0 %2015
      %v2017 = vsel %vm762, %v2013, 0.0
      %2018 = vadd.xlane.f32.xlu0 %v2017
      %v2019 = vpop.xlane.xlu0 %2018
      %v2020 = vmul.f32 %v2016, %v795
      %v2021 = vmul.f32 %v2019, %v795
      %v2022 = vadd.f32 %v2020, 1e-05
      %v2023 = vadd.f32 %v2021, 1e-05
      %v2024 = vrsqrt.pop %v2022
      %v2025 = vrsqrt.pop %v2023
      %v2026 = vmul.f32 %v2010, %v2024
      %v2027 = vmul.f32 %v2011, %v2025
      %v2029 = vlaneseq
      %v2030 = vshrl.u32 %v2029, 7
      %v2031 = vsub.s32 0, %v2030
      %v2032 = vrot.slane %v1999, %v2031
      %v2034 = vmul.f32 %v2026, %v2032
      %v2035 = vmul.f32 %v2027, %v2032
      %v2037 = vlaneseq
      %v2038 = vshrl.u32 %v2037, 7
      %v2039 = vsub.s32 0, %v2038
      %v2040 = vrot.slane %v2001, %v2039
      %v2042 = vadd.f32 %v2034, %v2040
      %v2043 = vadd.f32 %v2035, %v2040
      %v2044 = vpack.c.bf16 %v2043, %v2042
      %s2045 = scalar_lea.vmem %s9, 16
      %v2046 = vld [vmem:[%s2045] sm:$0xf]
      %v2047 = vld [vmem:[%s2045 + $0x4] sm:$0xf]
      %v2048 = vld [vmem:[%s2045 + $0x8] sm:$0xf]
      %v2049 = vld [vmem:[%s2045 + $0xc] sm:$0xf]
      %s2050 = scalar_lea.vmem %s10, 1
      %v2051 = vld [vmem:[%s2050] sm:$0x1]
      %v2053 = vlaneseq
      %v2054 = vshrl.u32 %v2053, 7
      %v2055 = vsub.s32 0, %v2054
      %v2056 = vrot.slane %v2051, %v2055
      %v2062 = vunpack.c.l.b16 %v2046
      %v2063 = vunpack.c.l.b16 %v2047
      %v2064 = vunpack.c.l.b16 %v2048
      %v2065 = vunpack.c.l.b16 %v2049
      %v2066 = vpack.c.b16 %v2063, %v2062
      %v2067 = vpack.c.b16 %v2065, %v2064
      %v2071 = vsel %vm762, %v2044, 0
      %2073 = vmatprep.subr.bf16.mxu0 0
      %2074 = vmatpush1.bf16.msra.mxu0 %v2066
      %2075 = vmatprep.subr.bf16.mxu0 0
      %2076 = vmatpush1.bf16.msra.mxu0 %v2067
      %2077 = vmatprep.subr.bf16.mxu0 0
      %2078 = vmatpush1.bf16.msra.mxu0 0
      %2079 = vmatprep.subr.bf16.mxu0 0
      %2080 = vmatpush1.bf16.msra.mxu0 0
      %2081 = vmatprep.subr.bf16.mxu0 0
      %2082 = vmatpush1.bf16.msra.mxu0 0
      %2083 = vmatprep.subr.bf16.mxu0 0
      %2084 = vmatpush1.bf16.msra.mxu0 0
      %2085 = vmatprep.subr.bf16.mxu0 0
      %2086 = vmatpush1.bf16.msra.mxu0 0
      %2087 = vmatprep.subr.bf16.mxu0 0
      %2088 = vmatpush1.bf16.msra.mxu0 0
      %2089 = vmatprep.subr.bf16.mxu0 0
      %2090 = vmatpush1.bf16.msra.mxu0 0
      %2091 = vmatprep.subr.bf16.mxu0 0
      %2092 = vmatpush1.bf16.msra.mxu0 0
      %2093 = vmatprep.subr.bf16.mxu0 0
      %2094 = vmatpush1.bf16.msra.mxu0 0
      %2095 = vmatprep.subr.bf16.mxu0 0
      %2096 = vmatpush1.bf16.msra.mxu0 0
      %2097 = vmatprep.subr.bf16.mxu0 0
      %2098 = vmatpush1.bf16.msra.mxu0 0
      %2099 = vmatprep.subr.bf16.mxu0 0
      %2100 = vmatpush1.bf16.msra.mxu0 0
      %2101 = vmatprep.subr.bf16.mxu0 0
      %2102 = vmatpush1.bf16.msra.mxu0 0
      %2103 = vmatprep.subr.bf16.mxu0 0
      %2104 = vmatpush1.bf16.msra.mxu0 0
      %2105 = vmatprep.mubr.bf16.mxu0 0
      %2106 = vmatmul.mubr.bf16.gmra.mrb[0].mxu0 %v2071
      %v2107 = vpop.f32.mrb[0].mxu0
      %v2108 = vadd.f32 %v2056, %v2107
      %v2109 = vpop.f32.mrb[0].mxu0
      %v2110 = vpop.f32.mrb[0].mxu0
      %v2111 = vadd.f32 %v2056, %v2110
      %v2112 = vpop.f32.mrb[0].mxu0
      %2113 = vdwg.mxu0
      %v2114 = vmul.f32 %v2108, %v2108
      %v2115 = vmul.f32 %v2111, %v2111
      %v2116 = vmul.f32 %v2108, %v2114
      %v2117 = vmul.f32 %v2111, %v2115
      %v2118 = vmul.f32 %v2116, 0.044715
      %v2119 = vmul.f32 %v2117, 0.044715
      %v2120 = vadd.f32 %v2108, %v2118
      %v2121 = vadd.f32 %v2111, %v2119
      %v2122 = vmul.f32 %v2120, 0.7978846
      %v2123 = vmul.f32 %v2121, 0.7978846
      %v2124 = vtanh.pop %v2122
      %v2125 = vtanh.pop %v2123
      %v2126 = vadd.f32 %v2124, 1.0
      %v2127 = vadd.f32 %v2125, 1.0
      %v2128 = vmul.f32 %v2126, 0.5
      %v2129 = vmul.f32 %v2127, 0.5
      %v2130 = vmul.f32 %v2108, %v2128
      %v2131 = vmul.f32 %v2111, %v2129
      %v2132 = vpack.c.bf16 %v2131, %v2130
      %s2133 = scalar_lea.vmem %s11, 64
      %v2134 = vld [vmem:[%s2133] sm:$0xf]
      %v2135 = vld [vmem:[%s2133 + $0x4] sm:$0xf]
      %v2136 = vld [vmem:[%s2133 + $0x8] sm:$0xf]
      %v2137 = vld [vmem:[%s2133 + $0xc] sm:$0xf]
      %v2138 = vld [vmem:[%s2133 + $0x10] sm:$0xf]
      %v2139 = vld [vmem:[%s2133 + $0x14] sm:$0xf]
      %v2140 = vld [vmem:[%s2133 + $0x18] sm:$0xf]
      %v2141 = vld [vmem:[%s2133 + $0x1c] sm:$0xf]
      %v2142 = vld [vmem:[%s2133 + $0x20] sm:$0xf]
      %v2143 = vld [vmem:[%s2133 + $0x24] sm:$0xf]
      %v2144 = vld [vmem:[%s2133 + $0x28] sm:$0xf]
      %v2145 = vld [vmem:[%s2133 + $0x2c] sm:$0xf]
      %v2146 = vld [vmem:[%s2133 + $0x30] sm:$0xf]
      %v2147 = vld [vmem:[%s2133 + $0x34] sm:$0xf]
      %v2148 = vld [vmem:[%s2133 + $0x38] sm:$0xf]
      %v2149 = vld [vmem:[%s2133 + $0x3c] sm:$0xf]
      %s2150 = scalar_lea.vmem %s12, 1
      %v2151 = vld [vmem:[%s2150] sm:$0x1]
      %v2153 = vlaneseq
      %v2154 = vshrl.u32 %v2153, 7
      %v2155 = vsub.s32 0, %v2154
      %v2156 = vrot.slane %v2151, %v2155
      %v2174 = vunpack.c.l.b16 %v2134
      %v2175 = vunpack.c.l.b16 %v2135
      %v2176 = vunpack.c.l.b16 %v2136
      %v2177 = vunpack.c.l.b16 %v2137
      %v2178 = vunpack.c.l.b16 %v2138
      %v2179 = vunpack.c.l.b16 %v2139
      %v2180 = vunpack.c.l.b16 %v2140
      %v2181 = vunpack.c.l.b16 %v2141
      %v2182 = vunpack.c.l.b16 %v2142
      %v2183 = vunpack.c.l.b16 %v2143
      %v2184 = vunpack.c.l.b16 %v2144
      %v2185 = vunpack.c.l.b16 %v2145
      %v2186 = vunpack.c.l.b16 %v2146
      %v2187 = vunpack.c.l.b16 %v2147
      %v2188 = vunpack.c.l.b16 %v2148
      %v2189 = vunpack.c.l.b16 %v2149
      %v2190 = vpack.c.b16 %v2175, %v2174
      %v2191 = vpack.c.b16 %v2177, %v2176
      %v2192 = vpack.c.b16 %v2179, %v2178
      %v2193 = vpack.c.b16 %v2181, %v2180
      %v2194 = vpack.c.b16 %v2183, %v2182
      %v2195 = vpack.c.b16 %v2185, %v2184
      %v2196 = vpack.c.b16 %v2187, %v2186
      %v2197 = vpack.c.b16 %v2189, %v2188
      %2206 = vmatprep.subr.bf16.mxu0 0
      %2207 = vmatpush1.bf16.msra.mxu0 %v2190
      %2208 = vmatprep.subr.bf16.mxu0 0
      %2209 = vmatpush1.bf16.msra.mxu0 %v2191
      %2210 = vmatprep.subr.bf16.mxu0 0
      %2211 = vmatpush1.bf16.msra.mxu0 %v2192
      %2212 = vmatprep.subr.bf16.mxu0 0
      %2213 = vmatpush1.bf16.msra.mxu0 %v2193
      %2214 = vmatprep.subr.bf16.mxu0 0
      %2215 = vmatpush1.bf16.msra.mxu0 %v2194
      %2216 = vmatprep.subr.bf16.mxu0 0
      %2217 = vmatpush1.bf16.msra.mxu0 %v2195
      %2218 = vmatprep.subr.bf16.mxu0 0
      %2219 = vmatpush1.bf16.msra.mxu0 %v2196
      %2220 = vmatprep.subr.bf16.mxu0 0
      %2221 = vmatpush1.bf16.msra.mxu0 %v2197
      %2222 = vmatprep.subr.bf16.mxu0 0
      %2223 = vmatpush1.bf16.msra.mxu0 0
      %2224 = vmatprep.subr.bf16.mxu0 0
      %2225 = vmatpush1.bf16.msra.mxu0 0
      %2226 = vmatprep.subr.bf16.mxu0 0
      %2227 = vmatpush1.bf16.msra.mxu0 0
      %2228 = vmatprep.subr.bf16.mxu0 0
      %2229 = vmatpush1.bf16.msra.mxu0 0
      %2230 = vmatprep.subr.bf16.mxu0 0
      %2231 = vmatpush1.bf16.msra.mxu0 0
      %2232 = vmatprep.subr.bf16.mxu0 0
      %2233 = vmatpush1.bf16.msra.mxu0 0
      %2234 = vmatprep.subr.bf16.mxu0 0
      %2235 = vmatpush1.bf16.msra.mxu0 0
      %2236 = vmatprep.subr.bf16.mxu0 0
      %2237 = vmatpush1.bf16.msra.mxu0 0
      %2238 = vmatprep.mubr.bf16.mxu0 0
      %2239 = vmatmul.mubr.bf16.gmra.mrb[0].mxu0 %v2132
      %v2240 = vpop.f32.mrb[0].mxu0
      %v2241 = vpop.f32.mrb[0].mxu0
      %v2242 = vpop.f32.mrb[0].mxu0
      %v2243 = vadd.f32 %v2156, %v2242
      %v2244 = vpop.f32.mrb[0].mxu0
      %2245 = vdwg.mxu0
      %v2246 = vadd.f32 %v1997, %v2243
      %2247 = vst.msk [vmem:[%s577] sm:$0xff] %vm762, %v2246
      %p2248 = scmp.lt.s32.totalorder %s28, 1
      %s2249 = scalar_select %p2248, %s28, 1
      %s2250 = smul.addr %s2249, 8
      %s2251 = scalar_lea.vmem %s17, %s2250
      // Predicated region
      $region89: #{phi_compressor_forward.1} parent=87 // pred_check
        %p2252 = pneg %p418
      $region90: #{phi_compressor_forward.1} parent=87 // pred_check_branch
        %2254 = sbr.rel (%p2252) target = $region92
      $region91: #{phi_compressor_forward.1} parent=87 // pred_region
        _
      $region92: #{phi_compressor_forward.1} parent=87 // pred_fallthru
        _
    $region88: #{phi_compressor_forward.1} parent=5 // pred_fallthru
      _
    %p2255 = scmp.le.s32.totalorder 2, %s23
    // Predicated region
    $region93: #{phi_compressor_forward.1} parent=5 // pred_check
      %p2256 = pneg %p2255
    $region94: #{phi_compressor_forward.1} parent=5 // pred_check_branch
      %2258 = sbr.rel (%p2256) target = $region96
    $region95: #{phi_compressor_forward.1} parent=5 // pred_region
      %s2259 = ssub.s32 %s23, 2
      // Predicated region
      $region97: #{phi_compressor_forward.1} parent=95 // pred_check
        %p2260 = pneg %p424
      $region98: #{phi_compressor_forward.1} parent=95 // pred_check_branch
        %2262 = sbr.rel (%p2260) target = $region100
      $region99: #{phi_compressor_forward.1} parent=95 // pred_region
        %p2263 = scmp.lt.s32.totalorder %s29, 1
        %s2264 = scalar_select %p2263, %s29, 1
        %s2265 = smul.addr %s2264, 8
        %s2266 = scalar_lea.vmem %s17, %s2265
      $region100: #{phi_compressor_forward.1} parent=95 // pred_fallthru
        _
    $region96: #{phi_compressor_forward.1} parent=5 // pred_fallthru
      _
  $region6: #{phi_compressor_forward.1} parent=0 // loop_footer
    %s27 = sadd.s32 1, %s23
  $region7: #{phi_compressor_forward.1} parent=0 // loop_footer_branch
    %22 = sbr.rel target = $region3
  $region8: #{phi_compressor_forward.1} parent=0 // loop_exit
    _

</llo_original>
